<compile_context>
chip_gen: v6e
topology: v6e:2x2x1
jax: 0.10.0
libtpu: 0.0.40
codegen_flags: <defaults>
</compile_context>

<pallas_src>
import math
from functools import partial

import jax
import jax.numpy as jnp
from jax.experimental import pallas as pl
from jax.experimental.pallas import tpu as pltpu


def _attn_only_fused_kernel(x_ref, wqkvT_ref, wprojT_ref, wuT_ref, logits_ref,
                            xs_ref, *, tb, L, h, dh, d, n_layers):
    """One (batch block, layer) grid step of the fused attention-only transformer.

    x_ref:      (tb*L, d)          embedded tokens for this batch block (flat slab)
    wqkvT_ref:  (layers, d, 3d)    all qkv weights, pre-transposed, q-scale folded in
    wprojT_ref: (layers, d, d)     all projection weights, pre-transposed
    wuT_ref:    (d, k_pad)         unembedding weight, pre-transposed + lane-padded
    logits_ref: (tb*L, k_pad)      output logits (written only at the last layer)
    xs_ref:     (tb*L, d)  VMEM    resident activations (carried across the layer axis)
    """
    layer = pl.program_id(1)

    @pl.when(layer == 0)
    def _():
        xs_ref[...] = x_ref[...]          # one HBM read of activations per batch block

    x = xs_ref[...]                       # (tb*L, d)

    # --- fused QKV projection: one (tb*L, d) x (d, 3d) MXU matmul ---
    # TODO(synk): cast operands to bf16 (keeping f32 accumulation) when the accuracy
    # budget allows; the 1e-4 reference tolerance used here does not permit it.
    qkv = jnp.dot(x, wqkvT_ref[layer], preferred_element_type=jnp.float32)   # (tb*L, 3d)

    # --- head split as pure value ops (no scratch stores / reloads) ---
    q_parts, k_parts, v_parts = [], [], []
    for b in range(tb):                                   # static loops: tb*h pieces
        rows = slice(b * L, (b + 1) * L)
        for head in range(h):
            lo = head * dh
            q_parts.append(qkv[rows, lo:lo + dh])         # 1/sqrt(dh) already in weight
            k_parts.append(qkv[rows, d + lo:d + lo + dh])
            v_parts.append(qkv[rows, 2 * d + lo:2 * d + lo + dh])
    qh = jnp.stack(q_parts)                               # (tb*h, L, dh)
    kh = jnp.stack(k_parts)
    vh = jnp.stack(v_parts)

    # --- batched (over tb*h) attention scores: (tb*h, L, L) ---
    # TODO(synk): if pl.lower_as_mlir shows an XLU transpose of kh inserted here, stage K
    # pre-transposed as (tb*h, dh, L) and switch to einsum('bqd,bdk->bqk', ...).
    s = jnp.einsum('bqd,bkd->bqk', qh, kh, preferred_element_type=jnp.float32)

    # causal mask: single 2-D compare broadcast over the batched-head dim
    qi = jax.lax.broadcasted_iota(jnp.int32, (L, L), 0)
    ki = jax.lax.broadcasted_iota(jnp.int32, (L, L), 1)
    s = jnp.where((qi < ki)[None, :, :], jnp.float32(-jnp.inf), s)

    # softmax over keys (approx=False: approx reciprocal is outside the 1e-4 budget)
    m = jnp.max(s, axis=-1, keepdims=True)
    p = jnp.exp(s - m)
    denom = jnp.sum(p, axis=-1, keepdims=True)
    p = p * pl.reciprocal(denom, approx=False)

    # --- batched attention-weighted values: (tb*h, L, dh) ---
    sa = jnp.einsum('bqk,bkd->bqd', p, vh, preferred_element_type=jnp.float32)

    # --- concat heads back to a flat (tb*L, d) slab (pure value ops) ---
    cat = jnp.concatenate(
        [jnp.concatenate([sa[b * h + head] for head in range(h)], axis=-1)
         for b in range(tb)],
        axis=0)

    # --- single full-width output projection + residual ---
    x_new = x + jnp.dot(cat, wprojT_ref[layer], preferred_element_type=jnp.float32)
    xs_ref[...] = x_new

    # --- fused unembedding at the last layer (lane-dense padded output) ---
    @pl.when(layer == n_layers - 1)
    def _():
        logits_ref[...] = jnp.dot(x_new, wuT_ref[...],
                                  preferred_element_type=jnp.float32)


def prepare_params(params, *, h):
    """One-time parameter preprocessing: transposes, stacking, q-scale fold, lane pad."""
    d = params["embedding"].shape[1]
    dh = d // h
    wqkvT = jnp.stack([w.T for (w, _) in params["blocks"]])          # (layers, d, 3d)
    # Fold the 1/sqrt(dh) attention scale into the q output columns (offline, free).
    wqkvT = wqkvT.at[:, :, :d].multiply(jnp.float32(1.0 / math.sqrt(dh)))
    wprojT = jnp.stack([p.T for (_, p) in params["blocks"]])         # (layers, d, d)
    wu = params["unembedding"]                                       # (vocab, d)
    vocab = wu.shape[0]
    k_pad = max(128, ((vocab + 127) // 128) * 128)                   # lane-dense logits
    wuT_pad = jnp.pad(wu.T, ((0, 0), (0, k_pad - vocab)))            # (d, k_pad)
    return {
        "embedding": params["embedding"],
        "wqkvT": wqkvT,
        "wprojT": wprojT,
        "wuT_pad": wuT_pad,
        "vocab": vocab,
    }


def _pick_batch_block(B):
    """Largest divisor of B that still leaves >= 2 batch blocks (keeps both v7x TCs fed).

    On single-TC chips (v5e/v6e) batch_block=B can be passed explicitly for the biggest
    matmul M and fewest grid steps.
    """
    if B < 2:
        return 1
    for tbc in range(B // 2, 0, -1):
        if B % tbc == 0:
            return tbc
    return 1


def transformer_attn_only_forward(tokens, prepped, *, h, batch_block=None):
    # TODO(synk): embedding lookup is a data-dependent gather; kept as plain-JAX glue.
    x = jnp.take(prepped["embedding"], tokens, axis=0)               # (B, L, d) f32
    B, L, d = x.shape
    n_layers = prepped["wqkvT"].shape[0]
    k_pad = prepped["wuT_pad"].shape[1]
    dh = d // h

    tb = _pick_batch_block(B) if batch_block is None else batch_block
    assert B % tb == 0, (B, tb)
    if (tb * L) % 8 != 0 and tb != B:
        tb = B            # whole-batch block: block dims then equal the full array dims
    nb = B // tb

    # Flat (B*L, d) activation slab: the kernel's matmuls run with M = tb*L rows and the
    # logits store is lane-dense. These reshapes are wrapper-side layout plumbing only.
    x2 = x.reshape(B * L, d)

    # TODO(synk): for long contexts / large vocab (esp. v7x's 64 MiB VMEM), tile L with an
    # online-softmax (flash) inner loop and split the unembedding onto its own grid axis;
    # whole-L blocks and a fused unembed are fine at these shapes.
    kern = partial(_attn_only_fused_kernel,
                   tb=tb, L=L, h=h, dh=dh, d=d, n_layers=n_layers)
    logits2 = pl.pallas_call(
        kern,
        out_shape=jax.ShapeDtypeStruct((B * L, k_pad), jnp.float32),
        grid_spec=pltpu.PrefetchScalarGridSpec(
            num_scalar_prefetch=0,
            grid=(nb, n_layers),                       # layer (carried) axis innermost
            in_specs=[
                pl.BlockSpec((tb * L, d), lambda b, l: (b, 0)),
                # Layer weights stay VMEM-resident for the whole launch (DMA'd once).
                pl.BlockSpec((n_layers, d, 3 * d), lambda b, l: (0, 0, 0)),
                pl.BlockSpec((n_layers, d, d), lambda b, l: (0, 0, 0)),
                pl.BlockSpec((d, k_pad), lambda b, l: (0, 0)),
            ],
            out_specs=pl.BlockSpec((tb * L, k_pad), lambda b, l: (b, 0)),
            scratch_shapes=[
                pltpu.VMEM((tb * L, d), jnp.float32),  # layer-resident activations
            ],
        ),
        compiler_params=pltpu.CompilerParams(
            dimension_semantics=("parallel", "arbitrary"),
            # explicit limit: the default scoped-VMEM budget on v5e is only 16 MiB
            vmem_limit_bytes=32 * 1024 * 1024,
        ),
    )(x2, prepped["wqkvT"], prepped["wprojT"], prepped["wuT_pad"])

    return logits2[:, :prepped["vocab"]].reshape(B, L, prepped["vocab"])


# ---------------- pure-JAX reference (mirrors the PyTorch einsum path) ----------------
def _ref_forward(tokens, params, *, h):
    x = params["embedding"][tokens]
    B, L, d = x.shape
    dh = d // h
    mask = jnp.arange(L)[:, None] < jnp.arange(L)[None, :]
    for wqkv, wproj in params["blocks"]:
        qkv = x @ wqkv.T
        q, k, v = qkv[..., :d], qkv[..., d:2 * d], qkv[..., 2 * d:]
        Q = q.reshape(B, L, h, dh)
        K = k.reshape(B, L, h, dh)
        V = v.reshape(B, L, h, dh)
        scores = jnp.einsum('blhd,bmhd->bhlm', Q, K) / math.sqrt(dh)
        scores = scores + jnp.where(mask, -jnp.inf, 0.0)
        attn = jax.nn.softmax(scores, axis=-1)
        sa = jnp.einsum('bhml,blhd->bmhd', attn, V)
        x = x + sa.reshape(B, L, d) @ wproj.T
    return x @ params["unembedding"].T


if __name__ == "__main__":
    # Small shapes consistent with the module: vocab k, model dim d, heads h,
    # layers, context length L, batch B.
    K_VOCAB, D, H, LAYERS, L, B = 16, 32, 4, 2, 8, 2

    key = jax.random.PRNGKey(0)
    k_emb, k_pos, k_tok, k_u, *k_blocks = jax.random.split(key, 4 + 2 * LAYERS)

    params = {
        # nn.Embedding default init: N(0, 1)
        "embedding": jax.random.normal(k_emb, (K_VOCAB, D), jnp.float32),
        # embedding_pos exists in __init__ but is never used in forward(); kept for fidelity.
        "embedding_pos": jax.random.normal(k_pos, (L, D), jnp.float32),
        # kaiming_normal_(nonlinearity='linear') -> std = 1/sqrt(fan_in) = 1/sqrt(D)
        "unembedding": jax.random.normal(k_u, (K_VOCAB, D), jnp.float32) / math.sqrt(D),
        "blocks": [],
    }
    for i in range(LAYERS):
        kq, kp = k_blocks[2 * i], k_blocks[2 * i + 1]
        wqkv = jax.random.normal(kq, (3 * D, D), jnp.float32) / math.sqrt(D)
        wproj = jax.random.normal(kp, (D, D), jnp.float32) / math.sqrt(D)
        params["blocks"].append((wqkv, wproj))

    tokens = jax.random.randint(k_tok, (B, L), 0, K_VOCAB, dtype=jnp.int32)

    prepped = prepare_params(params, h=H)            # one-time transposes / scale / pad
    logits = transformer_attn_only_forward(tokens, prepped, h=H)
    logits = jax.block_until_ready(logits)

    ref = _ref_forward(tokens, params, h=H)
    assert logits.shape == (B, L, K_VOCAB), logits.shape
    max_err = float(jnp.max(jnp.abs(logits - ref)))
    assert jnp.allclose(logits, ref, atol=1e-4, rtol=1e-4), max_err

    print("KERNEL_OK")
</pallas_src>

<mosaic_0001>
module attributes {stable_mosaic.version = 11 : i64} {
  func.func @_attn_only_fused_kernel(%arg0: i32, %arg1: i32, %arg2: memref<8x32xf32, #tpu.memory_space<vmem>>, %arg3: memref<2x32x96xf32, #tpu.memory_space<vmem>>, %arg4: memref<2x32x32xf32, #tpu.memory_space<vmem>>, %arg5: memref<32x128xf32, #tpu.memory_space<vmem>>, %arg6: memref<8x128xf32, #tpu.memory_space<vmem>>, %arg7: memref<8x32xf32, #tpu.memory_space<vmem>>) attributes {dimension_semantics = [#tpu.dimension_semantics<parallel>, #tpu.dimension_semantics<arbitrary>], iteration_bounds = array<i64: 2, 2>, scalar_prefetch = 0 : i64, scratch_operands = 1 : i64, tpu.core_type = #tpu.core_type<tc>, window_params = [{transform_indices = @transform_0, window_bounds = array<i64: 8, 32>}, {pipeline_mode = #tpu.pipeline_mode<synchronous>, transform_indices = @transform_1, window_bounds = array<i64: 2, 32, 96>}, {pipeline_mode = #tpu.pipeline_mode<synchronous>, transform_indices = @transform_2, window_bounds = array<i64: 2, 32, 32>}, {pipeline_mode = #tpu.pipeline_mode<synchronous>, transform_indices = @transform_3, window_bounds = array<i64: 32, 128>}, {transform_indices = @transform_4, window_bounds = array<i64: 8, 128>}]} {
    %c0_i32 = arith.constant 0 : i32
    %0 = arith.cmpi eq, %arg1, %c0_i32 : i32
    %1 = arith.extui %0 : i1 to i32
    %c0_i32_0 = arith.constant 0 : i32
    %2 = arith.cmpi ne, %1, %c0_i32_0 : i32
    scf.if %2 {
      %c0_15 = arith.constant 0 : index
      %c0_16 = arith.constant 0 : index
      %73 = vector.load %arg2[%c0_15, %c0_16] : memref<8x32xf32, #tpu.memory_space<vmem>>, vector<8x32xf32>
      %c0_17 = arith.constant 0 : index
      %c0_18 = arith.constant 0 : index
      %74 = vector.load %arg7[%c0_17, %c0_18] : memref<8x32xf32, #tpu.memory_space<vmem>>, vector<8x32xf32>
      tpu.vector_store %arg7[%c0_17, %c0_18], %73 {strides = array<i32>} : memref<8x32xf32, #tpu.memory_space<vmem>>, vector<8x32xf32>,
    } else {
    }
    %c0 = arith.constant 0 : index
    %c0_1 = arith.constant 0 : index
    %3 = vector.load %arg7[%c0, %c0_1] : memref<8x32xf32, #tpu.memory_space<vmem>>, vector<8x32xf32>
    %4 = arith.index_cast %arg1 : i32 to index
    %c0_2 = arith.constant 0 : index
    %c0_3 = arith.constant 0 : index
    %5 = vector.load %arg3[%4, %c0_2, %c0_3] : memref<2x32x96xf32, #tpu.memory_space<vmem>>, vector<1x32x96xf32>
    %6 = vector.shape_cast %5 : vector<1x32x96xf32> to vector<32x96xf32>
    %cst = arith.constant dense<0.000000e+00> : vector<8x96xf32>
    %7 = tpu.matmul %3, %6, %cst {dimension_numbers = #tpu.dot_dimension_numbers<[1], [0], [0], [1], [0, 0, 1, 1], [], []>} : vector<8x32xf32>, vector<32x96xf32>, vector<8x96xf32> -> vector<8x96xf32>
    %8 = vector.extract_strided_slice %7 {offsets = [0, 0], sizes = [8, 8], strides = [1, 1]} : vector<8x96xf32> to vector<8x8xf32>
    %9 = vector.extract_strided_slice %7 {offsets = [0, 32], sizes = [8, 8], strides = [1, 1]} : vector<8x96xf32> to vector<8x8xf32>
    %10 = vector.extract_strided_slice %7 {offsets = [0, 64], sizes = [8, 8], strides = [1, 1]} : vector<8x96xf32> to vector<8x8xf32>
    %11 = vector.extract_strided_slice %7 {offsets = [0, 8], sizes = [8, 8], strides = [1, 1]} : vector<8x96xf32> to vector<8x8xf32>
    %12 = vector.extract_strided_slice %7 {offsets = [0, 40], sizes = [8, 8], strides = [1, 1]} : vector<8x96xf32> to vector<8x8xf32>
    %13 = vector.extract_strided_slice %7 {offsets = [0, 72], sizes = [8, 8], strides = [1, 1]} : vector<8x96xf32> to vector<8x8xf32>
    %14 = vector.extract_strided_slice %7 {offsets = [0, 16], sizes = [8, 8], strides = [1, 1]} : vector<8x96xf32> to vector<8x8xf32>
    %15 = vector.extract_strided_slice %7 {offsets = [0, 48], sizes = [8, 8], strides = [1, 1]} : vector<8x96xf32> to vector<8x8xf32>
    %16 = vector.extract_strided_slice %7 {offsets = [0, 80], sizes = [8, 8], strides = [1, 1]} : vector<8x96xf32> to vector<8x8xf32>
    %17 = vector.extract_strided_slice %7 {offsets = [0, 24], sizes = [8, 8], strides = [1, 1]} : vector<8x96xf32> to vector<8x8xf32>
    %18 = vector.extract_strided_slice %7 {offsets = [0, 56], sizes = [8, 8], strides = [1, 1]} : vector<8x96xf32> to vector<8x8xf32>
    %19 = vector.extract_strided_slice %7 {offsets = [0, 88], sizes = [8, 8], strides = [1, 1]} : vector<8x96xf32> to vector<8x8xf32>
    %20 = vector.shape_cast %8 : vector<8x8xf32> to vector<1x8x8xf32>
    %21 = vector.shape_cast %11 : vector<8x8xf32> to vector<1x8x8xf32>
    %22 = vector.shape_cast %14 : vector<8x8xf32> to vector<1x8x8xf32>
    %23 = vector.shape_cast %17 : vector<8x8xf32> to vector<1x8x8xf32>
    %24 = tpu.concatenate %20, %21, %22, %23 in 0 : vector<1x8x8xf32>, vector<1x8x8xf32>, vector<1x8x8xf32>, vector<1x8x8xf32> -> vector<4x8x8xf32>
    %25 = vector.shape_cast %9 : vector<8x8xf32> to vector<1x8x8xf32>
    %26 = vector.shape_cast %12 : vector<8x8xf32> to vector<1x8x8xf32>
    %27 = vector.shape_cast %15 : vector<8x8xf32> to vector<1x8x8xf32>
    %28 = vector.shape_cast %18 : vector<8x8xf32> to vector<1x8x8xf32>
    %29 = tpu.concatenate %25, %26, %27, %28 in 0 : vector<1x8x8xf32>, vector<1x8x8xf32>, vector<1x8x8xf32>, vector<1x8x8xf32> -> vector<4x8x8xf32>
    %30 = vector.shape_cast %10 : vector<8x8xf32> to vector<1x8x8xf32>
    %31 = vector.shape_cast %13 : vector<8x8xf32> to vector<1x8x8xf32>
    %32 = vector.shape_cast %16 : vector<8x8xf32> to vector<1x8x8xf32>
    %33 = vector.shape_cast %19 : vector<8x8xf32> to vector<1x8x8xf32>
    %34 = tpu.concatenate %30, %31, %32, %33 in 0 : vector<1x8x8xf32>, vector<1x8x8xf32>, vector<1x8x8xf32>, vector<1x8x8xf32> -> vector<4x8x8xf32>
    "tpu.trace_start"() <{level = 10 : i32, message = "bqd,bkd->bqk"}> : () -> ()
    %cst_4 = arith.constant dense<0.000000e+00> : vector<4x8x8xf32>
    %35 = tpu.matmul %24, %29, %cst_4 {dimension_numbers = #tpu.dot_dimension_numbers<[2], [2], [1], [1], [0, 0, 0, 1, 1, 1], [0], [0]>} : vector<4x8x8xf32>, vector<4x8x8xf32>, vector<4x8x8xf32> -> vector<4x8x8xf32>
    "tpu.trace_stop"() : () -> ()
    %36 = tpu.iota {dimensions = array<i32: 0>} : vector<8x8xi32>
    %37 = tpu.iota {dimensions = array<i32: 1>} : vector<8x8xi32>
    %38 = arith.cmpi slt, %36, %37 : vector<8x8xi32>
    %39 = vector.shape_cast %38 : vector<8x8xi1> to vector<1x8x8xi1>
    %cst_5 = arith.constant 0xFF800000 : f32
    %40 = vector.shape_cast %39 : vector<1x8x8xi1> to vector<1x8x8xi1>
    %41 = vector.broadcast %40 : vector<1x8x8xi1> to vector<4x8x8xi1>
    %42 = vector.broadcast %cst_5 : f32 to vector<4x8x8xf32>
    %43 = arith.select %41, %42, %35 : vector<4x8x8xi1>, vector<4x8x8xf32>
    %cst_6 = arith.constant dense<0xFF800000> : vector<4x8xf32>
    %44 = vector.multi_reduction <maximumf>, %43, %cst_6 [2] : vector<4x8x8xf32> to vector<4x8xf32>
    %45 = vector.shape_cast %44 : vector<4x8xf32> to vector<4x8x1xf32>
    %46 = vector.broadcast %45 : vector<4x8x1xf32> to vector<4x8x8xf32>
    %47 = arith.subf %43, %46 : vector<4x8x8xf32>
    %48 = math.exp %47 : vector<4x8x8xf32>
    %cst_7 = arith.constant dense<0.000000e+00> : vector<4x8xf32>
    %49 = vector.multi_reduction <add>, %48, %cst_7 [2] : vector<4x8x8xf32> to vector<4x8xf32>
    %50 = vector.shape_cast %49 : vector<4x8xf32> to vector<4x8x1xf32>
    %51 = tpu.reciprocal %50 : vector<4x8x1xf32> -> vector<4x8x1xf32>
    %52 = vector.broadcast %51 : vector<4x8x1xf32> to vector<4x8x8xf32>
    %53 = arith.mulf %48, %52 : vector<4x8x8xf32>
    "tpu.trace_start"() <{level = 10 : i32, message = "bqk,bkd->bqd"}> : () -> ()
    %cst_8 = arith.constant dense<0.000000e+00> : vector<4x8x8xf32>
    %54 = tpu.matmul %53, %34, %cst_8 {dimension_numbers = #tpu.dot_dimension_numbers<[2], [1], [1], [2], [0, 0, 0, 1, 1, 2], [0], [0]>} : vector<4x8x8xf32>, vector<4x8x8xf32>, vector<4x8x8xf32> -> vector<4x8x8xf32>
    "tpu.trace_stop"() : () -> ()
    %55 = vector.extract_strided_slice %54 {offsets = [0, 0, 0], sizes = [1, 8, 8], strides = [1, 1, 1]} : vector<4x8x8xf32> to vector<1x8x8xf32>
    %56 = vector.shape_cast %55 : vector<1x8x8xf32> to vector<8x8xf32>
    %57 = vector.extract_strided_slice %54 {offsets = [1, 0, 0], sizes = [1, 8, 8], strides = [1, 1, 1]} : vector<4x8x8xf32> to vector<1x8x8xf32>
    %58 = vector.shape_cast %57 : vector<1x8x8xf32> to vector<8x8xf32>
    %59 = vector.extract_strided_slice %54 {offsets = [2, 0, 0], sizes = [1, 8, 8], strides = [1, 1, 1]} : vector<4x8x8xf32> to vector<1x8x8xf32>
    %60 = vector.shape_cast %59 : vector<1x8x8xf32> to vector<8x8xf32>
    %61 = vector.extract_strided_slice %54 {offsets = [3, 0, 0], sizes = [1, 8, 8], strides = [1, 1, 1]} : vector<4x8x8xf32> to vector<1x8x8xf32>
    %62 = vector.shape_cast %61 : vector<1x8x8xf32> to vector<8x8xf32>
    %63 = tpu.concatenate %56, %58, %60, %62 in 1 : vector<8x8xf32>, vector<8x8xf32>, vector<8x8xf32>, vector<8x8xf32> -> vector<8x32xf32>
    %64 = arith.index_cast %arg1 : i32 to index
    %c0_9 = arith.constant 0 : index
    %c0_10 = arith.constant 0 : index
    %65 = vector.load %arg4[%64, %c0_9, %c0_10] : memref<2x32x32xf32, #tpu.memory_space<vmem>>, vector<1x32x32xf32>
    %66 = vector.shape_cast %65 : vector<1x32x32xf32> to vector<32x32xf32>
    %cst_11 = arith.constant dense<0.000000e+00> : vector<8x32xf32>
    %67 = tpu.matmul %63, %66, %cst_11 {dimension_numbers = #tpu.dot_dimension_numbers<[1], [0], [0], [1], [0, 0, 1, 1], [], []>} : vector<8x32xf32>, vector<32x32xf32>, vector<8x32xf32> -> vector<8x32xf32>
    %68 = arith.addf %3, %67 : vector<8x32xf32>
    %c0_12 = arith.constant 0 : index
    %c0_13 = arith.constant 0 : index
    %69 = vector.load %arg7[%c0_12, %c0_13] : memref<8x32xf32, #tpu.memory_space<vmem>>, vector<8x32xf32>
    tpu.vector_store %arg7[%c0_12, %c0_13], %68 {strides = array<i32>} : memref<8x32xf32, #tpu.memory_space<vmem>>, vector<8x32xf32>,
    %c1_i32 = arith.constant 1 : i32
    %70 = arith.cmpi eq, %arg1, %c1_i32 : i32
    %71 = arith.extui %70 : i1 to i32
    %c0_i32_14 = arith.constant 0 : i32
    %72 = arith.cmpi ne, %71, %c0_i32_14 : i32
    scf.if %72 {
      %c0_15 = arith.constant 0 : index
      %c0_16 = arith.constant 0 : index
      %73 = vector.load %arg5[%c0_15, %c0_16] : memref<32x128xf32, #tpu.memory_space<vmem>>, vector<32x128xf32>
      %cst_17 = arith.constant dense<0.000000e+00> : vector<8x128xf32>
      %74 = tpu.matmul %68, %73, %cst_17 {dimension_numbers = #tpu.dot_dimension_numbers<[1], [0], [0], [1], [0, 0, 1, 1], [], []>} : vector<8x32xf32>, vector<32x128xf32>, vector<8x128xf32> -> vector<8x128xf32>
      %c0_18 = arith.constant 0 : index
      %c0_19 = arith.constant 0 : index
      %75 = vector.load %arg6[%c0_18, %c0_19] : memref<8x128xf32, #tpu.memory_space<vmem>>, vector<8x128xf32>
      tpu.vector_store %arg6[%c0_18, %c0_19], %74 {strides = array<i32>} : memref<8x128xf32, #tpu.memory_space<vmem>>, vector<8x128xf32>,
    } else {
    }
    return
  }
  func.func @transform_0(%arg0: i32, %arg1: i32) -> (i32, i32) {
    %c0_i32 = arith.constant 0 : i32
    %c0_i32_0 = arith.constant 0 : i32
    return %arg0, %c0_i32 : i32, i32
  }
  func.func @transform_1(%arg0: i32, %arg1: i32) -> (i32, i32, i32) {
    %c0_i32 = arith.constant 0 : i32
    %c0_i32_0 = arith.constant 0 : i32
    %c0_i32_1 = arith.constant 0 : i32
    %c0_i32_2 = arith.constant 0 : i32
    return %c0_i32, %c0_i32_0, %c0_i32_1 : i32, i32, i32
  }
  func.func @transform_2(%arg0: i32, %arg1: i32) -> (i32, i32, i32) {
    %c0_i32 = arith.constant 0 : i32
    %c0_i32_0 = arith.constant 0 : i32
    %c0_i32_1 = arith.constant 0 : i32
    %c0_i32_2 = arith.constant 0 : i32
    return %c0_i32, %c0_i32_0, %c0_i32_1 : i32, i32, i32
  }
  func.func @transform_3(%arg0: i32, %arg1: i32) -> (i32, i32) {
    %c0_i32 = arith.constant 0 : i32
    %c0_i32_0 = arith.constant 0 : i32
    %c0_i32_1 = arith.constant 0 : i32
    return %c0_i32, %c0_i32_0 : i32, i32
  }
  func.func @transform_4(%arg0: i32, %arg1: i32) -> (i32, i32) {
    %c0_i32 = arith.constant 0 : i32
    %c0_i32_0 = arith.constant 0 : i32
    return %arg0, %c0_i32 : i32, i32
  }
}

</mosaic_0001>

<llo_original>
// kernel: tpu_custom_call.1
$region0: #{tpu_custom_call.1}
  #allocation0 [shape = 'u32[]', space=smem, size = 0x4, offset = 0x4, fixed_abs, tag = 'smem constant byte address 0x4 - core index']
  #allocation1 [shape = 'u32[144,128]{1,0:T(1,128)}', space=vmem, size = 0x12000, scoped, tag = 'internal scratch']
  #allocation2 [shape = 'f32[8,32]{1,0:T(8,128)}', space=vmem, size = 0x1000, scoped, tag = 'scratch operand']
  %s0 = inlined_call_operand.hbm [shape: f32[16,32], index: 0, kind: input, shape index: {}]
  %s1 = inlined_call_operand.hbm [shape: f32[2,32,96], index: 1, kind: input, shape index: {}]
  %s2 = inlined_call_operand.hbm [shape: f32[2,32,32], index: 2, kind: input, shape index: {}]
  %s3 = inlined_call_operand.hbm [shape: f32[32,128], index: 3, kind: input, shape index: {}]
  %s4 = inlined_call_operand.hbm [shape: f32[16,128], index: 4, kind: output, shape index: {}]
  %s5 = sld [smem:[#allocation0]]
  $region73: #{tpu_custom_call.1} parent=0
    _
  %s7 = ssub.s32 1, %s5
  %s8 = scalar_select 0, %s7, %s5
  $region1: #{tpu_custom_call.1} parent=0
    #allocation3 [shape = 'u8[8192]{0}', space=vmem, size = 0x2000, scoped, tag = 'input window, operand 0']
    #allocation4 [shape = 's32[2]{0}', space=sflag, size = 0x8, scoped, tag = 'scoped memory for tpu_custom_call.1']
    #allocation5 [shape = 's32[2]{0}', space=sflag, size = 0x8, scoped, tag = 'scoped memory for tpu_custom_call.1']
    #allocation6 [shape = 'u8[32768]{0}', space=vmem, size = 0x8000, scoped, tag = 'input window, operand 1, single buffered']
    #allocation7 [shape = 's32[1]{0}', space=sflag, size = 0x4, scoped, tag = 'scoped memory for tpu_custom_call.1']
    #allocation8 [shape = 'u8[32768]{0}', space=vmem, size = 0x8000, scoped, tag = 'input window, operand 2, single buffered']
    #allocation9 [shape = 'u8[16384]{0}', space=vmem, size = 0x4000, scoped, tag = 'input window, operand 3, single buffered']
    #allocation10 [shape = 's32[1]{0}', space=sflag, size = 0x4, scoped, tag = 'scoped memory for tpu_custom_call.1']
    #allocation11 [shape = 'u8[8192]{0}', space=vmem, size = 0x2000, scoped, tag = 'output window, operand 0']
    %9 = vsyncpa [#allocation4], 0
    %s10 = scalar_lea.sflag [#allocation4], 1
    %11 = vsyncpa %s10, 0
    %12 = vsyncpa [#allocation7], 0
    %13 = vsyncpa [#allocation10], 0
    %14 = vsyncpa [#allocation5], 0
    %s15 = scalar_lea.sflag [#allocation5], 1
    %16 = vsyncpa %s15, 0
    loop: start=0, step=1, limit=6
    $region2: #{tpu_custom_call.1} parent=1 // loop_pre_header
      _
    $region3: #{tpu_custom_call.1} parent=1 // loop_header
      %s18 = sphi 0, %s22
      %p19 = scmp.ge.s32.totalorder %s18, 6
      %s25 = sphi 0, %s37
      %s26 = sphi 0, %s33
      %s27 = sphi 0, %s25
      %s28 = sphi 0, %s26
      %s29 = sphi 0, %s27
      %s30 = sphi 0, %s28
      %s40 = sphi 0, %s42
      %s43 = sphi 0, %s40
      %s44 = sphi 0, %s43
      %s60 = sphi 0, %s44
      %s64 = sphi 0, %s64
      %s66 = sphi 0, %s64
      %s67 = sphi 0, %s66
      %s81 = sphi 0, %s67
      %s85 = sphi 0, %s85
      %s87 = sphi 0, %s85
      %s88 = sphi 0, %s87
      %s102 = sphi 0, %s88
      %s106 = sphi 0, %s106
      %s108 = sphi 0, %s106
      %s109 = sphi 0, %s108
      %s123 = sphi 0, %s109
      %s129 = sphi 0, %s131
      %s132 = sphi 0, %s129
      %s133 = sphi 0, %s132
      %s149 = sphi 0, %s133
    $region4: #{tpu_custom_call.1} parent=1 // loop_header_branch
      %21 = sbr.rel (%p19) target = $region8
    $region5: #{tpu_custom_call.1} parent=1 // loop_body
      %s23 = ssub.s32 %s18, 1
      %s24 = ssub.s32 %s18, 2
      %s31 = sadd.s32 1, %s26
      %p32 = scmp.ge.s32.totalorder %s31, 2
      %s33 = scalar_select %p32, 0, %s31
      %s34 = sadd.s32 1, %s25
      %s35 = scalar_select %p32, %s34, %s25
      %p36 = scmp.ge.s32.totalorder %s35, 2
      %s37 = scalar_select %p36, 0, %s35
      %s38 = ssub.s32 %s25, %s37
      %p39 = scmp.eq.s32.totalorder %s38, 0
      %s41 = sadd.s32 %s40, 1
      %s42 = scalar_select %p39, %s40, %s41
      %p45 = pneg %p39
      %p46 = scmp.eq.s32.totalorder %s18, 3
      %p47 = por %p45, %p46
      %p48 = scmp.ne.s32.totalorder %s40, %s43
      %p49 = scmp.eq.s32.totalorder %s18, 0
      %p50 = por %p48, %p49
      %p51 = scmp.ne.s32.totalorder %s40, %s43
      %p52 = scmp.eq.s32.totalorder %s23, 3
      %p53 = por %p51, %p52
      %p54 = scmp.ne.s32.totalorder %s43, %s44
      %p55 = scmp.eq.s32.totalorder %s23, 0
      %p56 = por %p54, %p55
      %p57 = scmp.ne.s32.totalorder %s43, %s44
      %p58 = scmp.eq.s32.totalorder %s24, 3
      %p59 = por %p57, %p58
      %p61 = scmp.ne.s32.totalorder %s44, %s60
      %p62 = scmp.eq.s32.totalorder %s24, 0
      %p63 = por %p61, %p62
      %s65 = sadd.s32 %s64, 1
      %p68 = scmp.eq.s32.totalorder %s18, 3
      %p69 = scmp.ne.s32.totalorder %s64, %s66
      %p70 = scmp.eq.s32.totalorder %s18, 0
      %p71 = por %p69, %p70
      %p72 = scmp.ne.s32.totalorder %s64, %s66
      %p73 = scmp.eq.s32.totalorder %s23, 3
      %p74 = por %p72, %p73
      %p75 = scmp.ne.s32.totalorder %s66, %s67
      %p76 = scmp.eq.s32.totalorder %s23, 0
      %p77 = por %p75, %p76
      %p78 = scmp.ne.s32.totalorder %s66, %s67
      %p79 = scmp.eq.s32.totalorder %s24, 3
      %p80 = por %p78, %p79
      %p82 = scmp.ne.s32.totalorder %s67, %s81
      %p83 = scmp.eq.s32.totalorder %s24, 0
      %p84 = por %p82, %p83
      %s86 = sadd.s32 %s85, 1
      %p89 = scmp.eq.s32.totalorder %s18, 3
      %p90 = scmp.ne.s32.totalorder %s85, %s87
      %p91 = scmp.eq.s32.totalorder %s18, 0
      %p92 = por %p90, %p91
      %p93 = scmp.ne.s32.totalorder %s85, %s87
      %p94 = scmp.eq.s32.totalorder %s23, 3
      %p95 = por %p93, %p94
      %p96 = scmp.ne.s32.totalorder %s87, %s88
      %p97 = scmp.eq.s32.totalorder %s23, 0
      %p98 = por %p96, %p97
      %p99 = scmp.ne.s32.totalorder %s87, %s88
      %p100 = scmp.eq.s32.totalorder %s24, 3
      %p101 = por %p99, %p100
      %p103 = scmp.ne.s32.totalorder %s88, %s102
      %p104 = scmp.eq.s32.totalorder %s24, 0
      %p105 = por %p103, %p104
      %s107 = sadd.s32 %s106, 1
      %p110 = scmp.eq.s32.totalorder %s18, 3
      %p111 = scmp.ne.s32.totalorder %s106, %s108
      %p112 = scmp.eq.s32.totalorder %s18, 0
      %p113 = por %p111, %p112
      %p114 = scmp.ne.s32.totalorder %s106, %s108
      %p115 = scmp.eq.s32.totalorder %s23, 3
      %p116 = por %p114, %p115
      %p117 = scmp.ne.s32.totalorder %s108, %s109
      %p118 = scmp.eq.s32.totalorder %s23, 0
      %p119 = por %p117, %p118
      %p120 = scmp.ne.s32.totalorder %s108, %s109
      %p121 = scmp.eq.s32.totalorder %s24, 3
      %p122 = por %p120, %p121
      %p124 = scmp.ne.s32.totalorder %s109, %s123
      %p125 = scmp.eq.s32.totalorder %s24, 0
      %p126 = por %p124, %p125
      %s127 = ssub.s32 %s25, %s37
      %p128 = scmp.eq.s32.totalorder %s127, 0
      %s130 = sadd.s32 %s129, 1
      %s131 = scalar_select %p128, %s129, %s130
      %p134 = pneg %p128
      %p135 = scmp.eq.s32.totalorder %s18, 3
      %p136 = por %p134, %p135
      %p137 = scmp.ne.s32.totalorder %s129, %s132
      %p138 = scmp.eq.s32.totalorder %s18, 0
      %p139 = por %p137, %p138
      %p140 = scmp.ne.s32.totalorder %s129, %s132
      %p141 = scmp.eq.s32.totalorder %s23, 3
      %p142 = por %p140, %p141
      %p143 = scmp.ne.s32.totalorder %s132, %s133
      %p144 = scmp.eq.s32.totalorder %s23, 0
      %p145 = por %p143, %p144
      %p146 = scmp.ne.s32.totalorder %s132, %s133
      %p147 = scmp.eq.s32.totalorder %s24, 3
      %p148 = por %p146, %p147
      %p150 = scmp.ne.s32.totalorder %s133, %s149
      %p151 = scmp.eq.s32.totalorder %s24, 0
      %p152 = por %p150, %p151
      %p153 = scmp.le.s32.totalorder 1, %s18
      %p154 = scmp.lt.s32.totalorder %s18, 5
      %p155 = pnand %p153, %p154
      %p156 = pneg %p155
      // Predicated region
      $region9: #{tpu_custom_call.1} parent=5 // pred_check
        _
      $region10: #{tpu_custom_call.1} parent=5 // pred_check_branch
        %158 = sbr.rel (%p155) target = $region12
      $region11: #{tpu_custom_call.1} parent=5 // pred_region
        %s159 = ssub.s32 %s18, 1
        // Predicated region
        $region13: #{tpu_custom_call.1} parent=11 // pred_check
          %p160 = pneg %p77
        $region14: #{tpu_custom_call.1} parent=11 // pred_check_branch
          %162 = sbr.rel (%p160) target = $region16
        $region15: #{tpu_custom_call.1} parent=11 // pred_region
          %s164 = ssub.s32 1024, 1024
          %165 = vsyncadd [#allocation7], %s164
          %s166 = sshll.u32 [#allocation6], 4
          %s167 = int_to_ptr.vmem [resolvable:$true] %s166
          %172 = dma.hbm_to_vmem [thread:$0]  %s1, 1024, %s167, [#allocation7], 128, 128, 8
        $region16: #{tpu_custom_call.1} parent=11 // pred_fallthru
          _
        // Predicated region
        $region17: #{tpu_custom_call.1} parent=11 // pred_check
          %p173 = pneg %p98
        $region18: #{tpu_custom_call.1} parent=11 // pred_check_branch
          %175 = sbr.rel (%p173) target = $region20
        $region19: #{tpu_custom_call.1} parent=11 // pred_region
          %s177 = ssub.s32 1024, 1024
          %178 = vsyncadd [#allocation7], %s177
          %s179 = sshll.u32 [#allocation8], 4
          %s180 = int_to_ptr.vmem [resolvable:$true] %s179
          %185 = dma.hbm_to_vmem [thread:$0]  %s2, 1024, %s180, [#allocation7], 128, 128, 8
        $region20: #{tpu_custom_call.1} parent=11 // pred_fallthru
          _
        // Predicated region
        $region21: #{tpu_custom_call.1} parent=11 // pred_check
          %p186 = pneg %p119
        $region22: #{tpu_custom_call.1} parent=11 // pred_check_branch
          %188 = sbr.rel (%p186) target = $region24
        $region23: #{tpu_custom_call.1} parent=11 // pred_region
          %s190 = ssub.s32 512, 512
          %191 = vsyncadd [#allocation10], %s190
          %s192 = sshll.u32 [#allocation9], 4
          %s193 = int_to_ptr.vmem [resolvable:$true] %s192
          %198 = dma.hbm_to_vmem [thread:$0]  %s3, 512, %s193, [#allocation10], 128, 128, 8
        $region24: #{tpu_custom_call.1} parent=11 // pred_fallthru
          _
      $region12: #{tpu_custom_call.1} parent=5 // pred_fallthru
        _
      %p199 = scmp.lt.s32.totalorder %s18, 4
      // Predicated region
      $region25: #{tpu_custom_call.1} parent=5 // pred_check
        %p200 = pneg %p199
      $region26: #{tpu_custom_call.1} parent=5 // pred_check_branch
        %202 = sbr.rel (%p200) target = $region28
      $region27: #{tpu_custom_call.1} parent=5 // pred_region
        // Predicated region
        $region29: #{tpu_custom_call.1} parent=27 // pred_check
          %p203 = pneg %p50
        $region30: #{tpu_custom_call.1} parent=27 // pred_check_branch
          %205 = sbr.rel (%p203) target = $region32
        $region31: #{tpu_custom_call.1} parent=27 // pred_region
          %s206 = sand.u32 %s40, 1
          %s207 = scalar_lea.sflag [#allocation4], %s206
          %s208 = sand.u32 %s40, 1
          %s209 = smul.addr %s208, 8
          %s210 = scalar_lea.vmem [#allocation3], %s209
          %s212 = ssub.s32 128, 128
          %213 = vsyncadd %s207, %s212
          %s214 = smul.addr %s25, 128
          %s215 = scalar_lea.hbm %s0, %s214
          %s217 = sshll.u32 %s210, 4
          %s218 = int_to_ptr.vmem [resolvable:$true] %s217
          %220 = dma.hbm_to_vmem [thread:$0]  %s215, 128, %s218, %s207
        $region32: #{tpu_custom_call.1} parent=27 // pred_fallthru
          _
      $region28: #{tpu_custom_call.1} parent=5 // pred_fallthru
        _
      %p221 = scmp.le.s32.totalorder 1, %s18
      %p222 = scmp.lt.s32.totalorder %s18, 5
      %p223 = pnand %p221, %p222
      %p224 = pneg %p223
      // Predicated region
      $region33: #{tpu_custom_call.1} parent=5 // pred_check
        _
      $region34: #{tpu_custom_call.1} parent=5 // pred_check_branch
        %226 = sbr.rel (%p223) target = $region36
      $region35: #{tpu_custom_call.1} parent=5 // pred_region
        %s227 = ssub.s32 %s18, 1
        %s228 = sand.u32 %s43, 1
        %s229 = scalar_lea.sflag [#allocation4], %s228
        %s230 = sand.u32 %s43, 1
        %s231 = smul.addr %s230, 8
        %s232 = scalar_lea.vmem [#allocation3], %s231
        // Predicated region
        $region37: #{tpu_custom_call.1} parent=35 // pred_check
          %p233 = pneg %p56
        $region38: #{tpu_custom_call.1} parent=35 // pred_check_branch
          %235 = sbr.rel (%p233) target = $region40
        $region39: #{tpu_custom_call.1} parent=35 // pred_region
          %236 = dma.done %s229, 128
        $region40: #{tpu_custom_call.1} parent=35 // pred_fallthru
          _
        // Predicated region
        $region41: #{tpu_custom_call.1} parent=35 // pred_check
          %p237 = pneg %p77
        $region42: #{tpu_custom_call.1} parent=35 // pred_check_branch
          %239 = sbr.rel (%p237) target = $region44
        $region43: #{tpu_custom_call.1} parent=35 // pred_region
          %240 = dma.done [#allocation7], 1024
        $region44: #{tpu_custom_call.1} parent=35 // pred_fallthru
          _
        // Predicated region
        $region45: #{tpu_custom_call.1} parent=35 // pred_check
          %p241 = pneg %p98
        $region46: #{tpu_custom_call.1} parent=35 // pred_check_branch
          %243 = sbr.rel (%p241) target = $region48
        $region47: #{tpu_custom_call.1} parent=35 // pred_region
          %244 = dma.done [#allocation7], 1024
        $region48: #{tpu_custom_call.1} parent=35 // pred_fallthru
          _
        // Predicated region
        $region49: #{tpu_custom_call.1} parent=35 // pred_check
          %p245 = pneg %p119
        $region50: #{tpu_custom_call.1} parent=35 // pred_check_branch
          %247 = sbr.rel (%p245) target = $region52
        $region51: #{tpu_custom_call.1} parent=35 // pred_region
          %248 = dma.done [#allocation10], 512
        $region52: #{tpu_custom_call.1} parent=35 // pred_fallthru
          _
        %s249 = sand.u32 %s43, 1
        %s250 = scalar_lea.sflag [#allocation4], %s249
        %s251 = sand.u32 %s43, 1
        %s252 = smul.addr %s251, 8
        %s253 = scalar_lea.vmem [#allocation3], %s252
        %p254 = pneg %p56
        %p255 = pneg %p53
        %p256 = pneg %p77
        %p257 = pneg %p74
        %p258 = pneg %p98
        %p259 = pneg %p95
        %p260 = pneg %p119
        %p261 = pneg %p116
        %p262 = pneg %p145
        %p263 = pneg %p142
        %s264 = sand.u32 %s132, 1
        %s265 = scalar_lea.sflag [#allocation5], %s264
        %s266 = sand.u32 %s132, 1
        %s267 = smul.addr %s266, 8
        %s268 = scalar_lea.vmem [#allocation11], %s267
        %p269 = scmp.eq.s32.totalorder %s28, 0
        // Predicated region
        $region53: #{tpu_custom_call.1} parent=35 // pred_check
          %p270 = pneg %p269
        $region54: #{tpu_custom_call.1} parent=35 // pred_check_branch
          %272 = sbr.rel (%p270) target = $region56
        $region55: #{tpu_custom_call.1} parent=35 // pred_region
          %v273 = vld [vmem:[%s232] sm:$0xff]
          %vm274 = vcmask 261120
          %275 = vst.msk [vmem:[#allocation2] sm:$0xff] %vm274, %v273
        $region56: #{tpu_custom_call.1} parent=35 // pred_fallthru
          _
        %v276 = vld [vmem:[#allocation2] sm:$0xff]
        %s277 = smul.u32 %s28, 32
        %s278 = scalar_lea.vmem [#allocation6], %s277
        %v279 = vld [vmem:[%s278] sm:$0xff]
        %v280 = vld [vmem:[%s278 + $0x8] sm:$0xff]
        %v281 = vld [vmem:[%s278 + $0x10] sm:$0xff]
        %v282 = vld [vmem:[%s278 + $0x18] sm:$0xff]
        %vm283 = vcmask 261120
        %v285 = vsel %vm283, %v276, 0
        %287 = vmatprep.subr.mxu0 0.0
        %288 = vmatpush1.msra.mxu0 0.0
        %289 = vmatprep.subr.mxu0 0.0
        %290 = vmatpush1.msra.mxu0 0.0
        %291 = vmatprep.subr.mxu0 0.0
        %292 = vmatpush1.msra.mxu0 0.0
        %293 = vmatprep.subr.mxu0 0.0
        %294 = vmatpush1.msra.mxu0 0.0
        %295 = vmatprep.subr.mxu0 0.0
        %296 = vmatpush1.msra.mxu0 0.0
        %297 = vmatprep.subr.mxu0 0.0
        %298 = vmatpush1.msra.mxu0 0.0
        %299 = vmatprep.subr.mxu0 0.0
        %300 = vmatpush1.msra.mxu0 0.0
        %301 = vmatprep.subr.mxu0 0.0
        %302 = vmatpush1.msra.mxu0 0.0
        %303 = vmatprep.subr.mxu0 0.0
        %304 = vmatpush1.msra.mxu0 0.0
        %305 = vmatprep.subr.mxu0 0.0
        %306 = vmatpush1.msra.mxu0 0.0
        %307 = vmatprep.subr.mxu0 0.0
        %308 = vmatpush1.msra.mxu0 0.0
        %309 = vmatprep.subr.mxu0 0.0
        %310 = vmatpush1.msra.mxu0 0.0
        %311 = vmatprep.subr.mxu0 0.0
        %312 = vmatpush1.msra.mxu0 %v282
        %313 = vmatprep.subr.mxu0 0.0
        %314 = vmatpush1.msra.mxu0 %v281
        %315 = vmatprep.subr.mxu0 0.0
        %316 = vmatpush1.msra.mxu0 %v280
        %317 = vmatprep.subr.mxu0 0.0
        %318 = vmatpush1.msra.mxu0 %v279
        %319 = vmatprep.subr.mxu0 0.0
        %320 = vmatpush2.msra.mxu0 0.0
        %321 = vmatprep.subr.mxu0 0.0
        %322 = vmatpush2.msra.mxu0 0.0
        %323 = vmatprep.subr.mxu0 0.0
        %324 = vmatpush2.msra.mxu0 0.0
        %325 = vmatprep.subr.mxu0 0.0
        %326 = vmatpush2.msra.mxu0 0.0
        %327 = vmatprep.subr.mxu0 0.0
        %328 = vmatpush2.msra.mxu0 0.0
        %329 = vmatprep.subr.mxu0 0.0
        %330 = vmatpush2.msra.mxu0 0.0
        %331 = vmatprep.subr.mxu0 0.0
        %332 = vmatpush2.msra.mxu0 0.0
        %333 = vmatprep.subr.mxu0 0.0
        %334 = vmatpush2.msra.mxu0 0.0
        %335 = vmatprep.subr.mxu0 0.0
        %336 = vmatpush2.msra.mxu0 0.0
        %337 = vmatprep.subr.mxu0 0.0
        %338 = vmatpush2.msra.mxu0 0.0
        %339 = vmatprep.subr.mxu0 0.0
        %340 = vmatpush2.msra.mxu0 0.0
        %341 = vmatprep.subr.mxu0 0.0
        %342 = vmatpush2.msra.mxu0 0.0
        %343 = vmatprep.subr.mxu0 0.0
        %344 = vmatpush2.msra.mxu0 0.0
        %345 = vmatprep.subr.mxu0 0.0
        %346 = vmatpush2.msra.mxu0 0.0
        %347 = vmatprep.subr.mxu0 0.0
        %348 = vmatpush2.msra.mxu0 0.0
        %349 = vmatprep.subr.mxu0 0.0
        %350 = vmatpush2.msra.mxu0 0.0
        %351 = vmatprep.mubr.f32.mxu0 0.0
        %352 = vmatmul.mubr.f32.gmra.mxu0 %v285
        %v353 = vpop.f32.mrf.mxu0
        %v354 = vadd.f32 0.0, %v353
        %v355 = vpop.f32.mrf.mxu0
        %356 = vdwg.mxu0
        %358 = vrot.lane.b32.xlu0 %v354, 120
        %v359 = vpop.permute.xlu0 %358
        %360 = vrot.lane.b32.xlu0 %v354, 112
        %v361 = vpop.permute.xlu0 %360
        %362 = vrot.lane.b32.xlu0 %v354, 104
        %v363 = vpop.permute.xlu0 %362
        %364 = vrot.lane.b32.xlu0 %v354, 96
        %v365 = vpop.permute.xlu0 %364
        %vm366 = vcmask 64512
        %v367 = vsel %vm366, %v354, 0
        %v369 = vsel %vm366, %v365, 0
        %371 = vmatprep.subr.mxu0 0.0
        %372 = vmatpush1.xpose.msra.mxu0 0.0
        %373 = vmatprep.subr.mxu0 0.0
        %374 = vmatpush1.xpose.msra.mxu0 0.0
        %375 = vmatprep.subr.mxu0 0.0
        %376 = vmatpush1.xpose.msra.mxu0 0.0
        %377 = vmatprep.subr.mxu0 0.0
        %378 = vmatpush1.xpose.msra.mxu0 0.0
        %379 = vmatprep.subr.mxu0 0.0
        %380 = vmatpush1.xpose.msra.mxu0 0.0
        %381 = vmatprep.subr.mxu0 0.0
        %382 = vmatpush1.xpose.msra.mxu0 0.0
        %383 = vmatprep.subr.mxu0 0.0
        %384 = vmatpush1.xpose.msra.mxu0 0.0
        %385 = vmatprep.subr.mxu0 0.0
        %386 = vmatpush1.xpose.msra.mxu0 0.0
        %387 = vmatprep.subr.mxu0 0.0
        %388 = vmatpush1.xpose.msra.mxu0 0.0
        %389 = vmatprep.subr.mxu0 0.0
        %390 = vmatpush1.xpose.msra.mxu0 0.0
        %391 = vmatprep.subr.mxu0 0.0
        %392 = vmatpush1.xpose.msra.mxu0 0.0
        %393 = vmatprep.subr.mxu0 0.0
        %394 = vmatpush1.xpose.msra.mxu0 0.0
        %395 = vmatprep.subr.mxu0 0.0
        %396 = vmatpush1.xpose.msra.mxu0 0.0
        %397 = vmatprep.subr.mxu0 0.0
        %398 = vmatpush1.xpose.msra.mxu0 0.0
        %399 = vmatprep.subr.mxu0 0.0
        %400 = vmatpush1.xpose.msra.mxu0 0.0
        %401 = vmatprep.subr.mxu0 0.0
        %402 = vmatpush1.xpose.msra.mxu0 %v369
        %403 = vmatprep.subr.mxu0 0.0
        %404 = vmatpush2.xpose.msra.mxu0 0.0
        %405 = vmatprep.subr.mxu0 0.0
        %406 = vmatpush2.xpose.msra.mxu0 0.0
        %407 = vmatprep.subr.mxu0 0.0
        %408 = vmatpush2.xpose.msra.mxu0 0.0
        %409 = vmatprep.subr.mxu0 0.0
        %410 = vmatpush2.xpose.msra.mxu0 0.0
        %411 = vmatprep.subr.mxu0 0.0
        %412 = vmatpush2.xpose.msra.mxu0 0.0
        %413 = vmatprep.subr.mxu0 0.0
        %414 = vmatpush2.xpose.msra.mxu0 0.0
        %415 = vmatprep.subr.mxu0 0.0
        %416 = vmatpush2.xpose.msra.mxu0 0.0
        %417 = vmatprep.subr.mxu0 0.0
        %418 = vmatpush2.xpose.msra.mxu0 0.0
        %419 = vmatprep.subr.mxu0 0.0
        %420 = vmatpush2.xpose.msra.mxu0 0.0
        %421 = vmatprep.subr.mxu0 0.0
        %422 = vmatpush2.xpose.msra.mxu0 0.0
        %423 = vmatprep.subr.mxu0 0.0
        %424 = vmatpush2.xpose.msra.mxu0 0.0
        %425 = vmatprep.subr.mxu0 0.0
        %426 = vmatpush2.xpose.msra.mxu0 0.0
        %427 = vmatprep.subr.mxu0 0.0
        %428 = vmatpush2.xpose.msra.mxu0 0.0
        %429 = vmatprep.subr.mxu0 0.0
        %430 = vmatpush2.xpose.msra.mxu0 0.0
        %431 = vmatprep.subr.mxu0 0.0
        %432 = vmatpush2.xpose.msra.mxu0 0.0
        %433 = vmatprep.subr.mxu0 0.0
        %434 = vmatpush2.xpose.msra.mxu0 0.0
        %435 = vmatprep.mubr.f32.mxu0 0.0
        %436 = vmatmul.mubr.f32.gmra.mxu0 %v367
        %v437 = vpop.f32.mrf.mxu0
        %v438 = vadd.f32 0.0, %v437
        %v439 = vpop.f32.mrf.mxu0
        %440 = vdwg.mxu0
        %441 = vrot.lane.b32.xlu0 %v359, 96
        %v442 = vpop.permute.xlu0 %441
        %v443 = vsel %vm366, %v359, 0
        %v445 = vsel %vm366, %v442, 0
        %447 = vmatprep.subr.mxu0 0.0
        %448 = vmatpush1.xpose.msra.mxu0 0.0
        %449 = vmatprep.subr.mxu0 0.0
        %450 = vmatpush1.xpose.msra.mxu0 0.0
        %451 = vmatprep.subr.mxu0 0.0
        %452 = vmatpush1.xpose.msra.mxu0 0.0
        %453 = vmatprep.subr.mxu0 0.0
        %454 = vmatpush1.xpose.msra.mxu0 0.0
        %455 = vmatprep.subr.mxu0 0.0
        %456 = vmatpush1.xpose.msra.mxu0 0.0
        %457 = vmatprep.subr.mxu0 0.0
        %458 = vmatpush1.xpose.msra.mxu0 0.0
        %459 = vmatprep.subr.mxu0 0.0
        %460 = vmatpush1.xpose.msra.mxu0 0.0
        %461 = vmatprep.subr.mxu0 0.0
        %462 = vmatpush1.xpose.msra.mxu0 0.0
        %463 = vmatprep.subr.mxu0 0.0
        %464 = vmatpush1.xpose.msra.mxu0 0.0
        %465 = vmatprep.subr.mxu0 0.0
        %466 = vmatpush1.xpose.msra.mxu0 0.0
        %467 = vmatprep.subr.mxu0 0.0
        %468 = vmatpush1.xpose.msra.mxu0 0.0
        %469 = vmatprep.subr.mxu0 0.0
        %470 = vmatpush1.xpose.msra.mxu0 0.0
        %471 = vmatprep.subr.mxu0 0.0
        %472 = vmatpush1.xpose.msra.mxu0 0.0
        %473 = vmatprep.subr.mxu0 0.0
        %474 = vmatpush1.xpose.msra.mxu0 0.0
        %475 = vmatprep.subr.mxu0 0.0
        %476 = vmatpush1.xpose.msra.mxu0 0.0
        %477 = vmatprep.subr.mxu0 0.0
        %478 = vmatpush1.xpose.msra.mxu0 %v445
        %479 = vmatprep.subr.mxu0 0.0
        %480 = vmatpush2.xpose.msra.mxu0 0.0
        %481 = vmatprep.subr.mxu0 0.0
        %482 = vmatpush2.xpose.msra.mxu0 0.0
        %483 = vmatprep.subr.mxu0 0.0
        %484 = vmatpush2.xpose.msra.mxu0 0.0
        %485 = vmatprep.subr.mxu0 0.0
        %486 = vmatpush2.xpose.msra.mxu0 0.0
        %487 = vmatprep.subr.mxu0 0.0
        %488 = vmatpush2.xpose.msra.mxu0 0.0
        %489 = vmatprep.subr.mxu0 0.0
        %490 = vmatpush2.xpose.msra.mxu0 0.0
        %491 = vmatprep.subr.mxu0 0.0
        %492 = vmatpush2.xpose.msra.mxu0 0.0
        %493 = vmatprep.subr.mxu0 0.0
        %494 = vmatpush2.xpose.msra.mxu0 0.0
        %495 = vmatprep.subr.mxu0 0.0
        %496 = vmatpush2.xpose.msra.mxu0 0.0
        %497 = vmatprep.subr.mxu0 0.0
        %498 = vmatpush2.xpose.msra.mxu0 0.0
        %499 = vmatprep.subr.mxu0 0.0
        %500 = vmatpush2.xpose.msra.mxu0 0.0
        %501 = vmatprep.subr.mxu0 0.0
        %502 = vmatpush2.xpose.msra.mxu0 0.0
        %503 = vmatprep.subr.mxu0 0.0
        %504 = vmatpush2.xpose.msra.mxu0 0.0
        %505 = vmatprep.subr.mxu0 0.0
        %506 = vmatpush2.xpose.msra.mxu0 0.0
        %507 = vmatprep.subr.mxu0 0.0
        %508 = vmatpush2.xpose.msra.mxu0 0.0
        %509 = vmatprep.subr.mxu0 0.0
        %510 = vmatpush2.xpose.msra.mxu0 0.0
        %511 = vmatprep.mubr.f32.mxu0 0.0
        %512 = vmatmul.mubr.f32.gmra.mxu0 %v443
        %v513 = vpop.f32.mrf.mxu0
        %v514 = vadd.f32 0.0, %v513
        %v515 = vpop.f32.mrf.mxu0
        %516 = vdwg.mxu0
        %517 = vrot.lane.b32.xlu0 %v361, 96
        %v518 = vpop.permute.xlu0 %517
        %v519 = vsel %vm366, %v361, 0
        %v521 = vsel %vm366, %v518, 0
        %523 = vmatprep.subr.mxu0 0.0
        %524 = vmatpush1.xpose.msra.mxu0 0.0
        %525 = vmatprep.subr.mxu0 0.0
        %526 = vmatpush1.xpose.msra.mxu0 0.0
        %527 = vmatprep.subr.mxu0 0.0
        %528 = vmatpush1.xpose.msra.mxu0 0.0
        %529 = vmatprep.subr.mxu0 0.0
        %530 = vmatpush1.xpose.msra.mxu0 0.0
        %531 = vmatprep.subr.mxu0 0.0
        %532 = vmatpush1.xpose.msra.mxu0 0.0
        %533 = vmatprep.subr.mxu0 0.0
        %534 = vmatpush1.xpose.msra.mxu0 0.0
        %535 = vmatprep.subr.mxu0 0.0
        %536 = vmatpush1.xpose.msra.mxu0 0.0
        %537 = vmatprep.subr.mxu0 0.0
        %538 = vmatpush1.xpose.msra.mxu0 0.0
        %539 = vmatprep.subr.mxu0 0.0
        %540 = vmatpush1.xpose.msra.mxu0 0.0
        %541 = vmatprep.subr.mxu0 0.0
        %542 = vmatpush1.xpose.msra.mxu0 0.0
        %543 = vmatprep.subr.mxu0 0.0
        %544 = vmatpush1.xpose.msra.mxu0 0.0
        %545 = vmatprep.subr.mxu0 0.0
        %546 = vmatpush1.xpose.msra.mxu0 0.0
        %547 = vmatprep.subr.mxu0 0.0
        %548 = vmatpush1.xpose.msra.mxu0 0.0
        %549 = vmatprep.subr.mxu0 0.0
        %550 = vmatpush1.xpose.msra.mxu0 0.0
        %551 = vmatprep.subr.mxu0 0.0
        %552 = vmatpush1.xpose.msra.mxu0 0.0
        %553 = vmatprep.subr.mxu0 0.0
        %554 = vmatpush1.xpose.msra.mxu0 %v521
        %555 = vmatprep.subr.mxu0 0.0
        %556 = vmatpush2.xpose.msra.mxu0 0.0
        %557 = vmatprep.subr.mxu0 0.0
        %558 = vmatpush2.xpose.msra.mxu0 0.0
        %559 = vmatprep.subr.mxu0 0.0
        %560 = vmatpush2.xpose.msra.mxu0 0.0
        %561 = vmatprep.subr.mxu0 0.0
        %562 = vmatpush2.xpose.msra.mxu0 0.0
        %563 = vmatprep.subr.mxu0 0.0
        %564 = vmatpush2.xpose.msra.mxu0 0.0
        %565 = vmatprep.subr.mxu0 0.0
        %566 = vmatpush2.xpose.msra.mxu0 0.0
        %567 = vmatprep.subr.mxu0 0.0
        %568 = vmatpush2.xpose.msra.mxu0 0.0
        %569 = vmatprep.subr.mxu0 0.0
        %570 = vmatpush2.xpose.msra.mxu0 0.0
        %571 = vmatprep.subr.mxu0 0.0
        %572 = vmatpush2.xpose.msra.mxu0 0.0
        %573 = vmatprep.subr.mxu0 0.0
        %574 = vmatpush2.xpose.msra.mxu0 0.0
        %575 = vmatprep.subr.mxu0 0.0
        %576 = vmatpush2.xpose.msra.mxu0 0.0
        %577 = vmatprep.subr.mxu0 0.0
        %578 = vmatpush2.xpose.msra.mxu0 0.0
        %579 = vmatprep.subr.mxu0 0.0
        %580 = vmatpush2.xpose.msra.mxu0 0.0
        %581 = vmatprep.subr.mxu0 0.0
        %582 = vmatpush2.xpose.msra.mxu0 0.0
        %583 = vmatprep.subr.mxu0 0.0
        %584 = vmatpush2.xpose.msra.mxu0 0.0
        %585 = vmatprep.subr.mxu0 0.0
        %586 = vmatpush2.xpose.msra.mxu0 0.0
        %587 = vmatprep.mubr.f32.mxu0 0.0
        %588 = vmatmul.mubr.f32.gmra.mxu0 %v519
        %v589 = vpop.f32.mrf.mxu0
        %v590 = vadd.f32 0.0, %v589
        %v591 = vpop.f32.mrf.mxu0
        %592 = vdwg.mxu0
        %593 = vrot.lane.b32.xlu0 %v363, 96
        %v594 = vpop.permute.xlu0 %593
        %v595 = vsel %vm366, %v363, 0
        %v597 = vsel %vm366, %v594, 0
        %599 = vmatprep.subr.mxu0 0.0
        %600 = vmatpush1.xpose.msra.mxu0 0.0
        %601 = vmatprep.subr.mxu0 0.0
        %602 = vmatpush1.xpose.msra.mxu0 0.0
        %603 = vmatprep.subr.mxu0 0.0
        %604 = vmatpush1.xpose.msra.mxu0 0.0
        %605 = vmatprep.subr.mxu0 0.0
        %606 = vmatpush1.xpose.msra.mxu0 0.0
        %607 = vmatprep.subr.mxu0 0.0
        %608 = vmatpush1.xpose.msra.mxu0 0.0
        %609 = vmatprep.subr.mxu0 0.0
        %610 = vmatpush1.xpose.msra.mxu0 0.0
        %611 = vmatprep.subr.mxu0 0.0
        %612 = vmatpush1.xpose.msra.mxu0 0.0
        %613 = vmatprep.subr.mxu0 0.0
        %614 = vmatpush1.xpose.msra.mxu0 0.0
        %615 = vmatprep.subr.mxu0 0.0
        %616 = vmatpush1.xpose.msra.mxu0 0.0
        %617 = vmatprep.subr.mxu0 0.0
        %618 = vmatpush1.xpose.msra.mxu0 0.0
        %619 = vmatprep.subr.mxu0 0.0
        %620 = vmatpush1.xpose.msra.mxu0 0.0
        %621 = vmatprep.subr.mxu0 0.0
        %622 = vmatpush1.xpose.msra.mxu0 0.0
        %623 = vmatprep.subr.mxu0 0.0
        %624 = vmatpush1.xpose.msra.mxu0 0.0
        %625 = vmatprep.subr.mxu0 0.0
        %626 = vmatpush1.xpose.msra.mxu0 0.0
        %627 = vmatprep.subr.mxu0 0.0
        %628 = vmatpush1.xpose.msra.mxu0 0.0
        %629 = vmatprep.subr.mxu0 0.0
        %630 = vmatpush1.xpose.msra.mxu0 %v597
        %631 = vmatprep.subr.mxu0 0.0
        %632 = vmatpush2.xpose.msra.mxu0 0.0
        %633 = vmatprep.subr.mxu0 0.0
        %634 = vmatpush2.xpose.msra.mxu0 0.0
        %635 = vmatprep.subr.mxu0 0.0
        %636 = vmatpush2.xpose.msra.mxu0 0.0
        %637 = vmatprep.subr.mxu0 0.0
        %638 = vmatpush2.xpose.msra.mxu0 0.0
        %639 = vmatprep.subr.mxu0 0.0
        %640 = vmatpush2.xpose.msra.mxu0 0.0
        %641 = vmatprep.subr.mxu0 0.0
        %642 = vmatpush2.xpose.msra.mxu0 0.0
        %643 = vmatprep.subr.mxu0 0.0
        %644 = vmatpush2.xpose.msra.mxu0 0.0
        %645 = vmatprep.subr.mxu0 0.0
        %646 = vmatpush2.xpose.msra.mxu0 0.0
        %647 = vmatprep.subr.mxu0 0.0
        %648 = vmatpush2.xpose.msra.mxu0 0.0
        %649 = vmatprep.subr.mxu0 0.0
        %650 = vmatpush2.xpose.msra.mxu0 0.0
        %651 = vmatprep.subr.mxu0 0.0
        %652 = vmatpush2.xpose.msra.mxu0 0.0
        %653 = vmatprep.subr.mxu0 0.0
        %654 = vmatpush2.xpose.msra.mxu0 0.0
        %655 = vmatprep.subr.mxu0 0.0
        %656 = vmatpush2.xpose.msra.mxu0 0.0
        %657 = vmatprep.subr.mxu0 0.0
        %658 = vmatpush2.xpose.msra.mxu0 0.0
        %659 = vmatprep.subr.mxu0 0.0
        %660 = vmatpush2.xpose.msra.mxu0 0.0
        %661 = vmatprep.subr.mxu0 0.0
        %662 = vmatpush2.xpose.msra.mxu0 0.0
        %663 = vmatprep.mubr.f32.mxu0 0.0
        %664 = vmatmul.mubr.f32.gmra.mxu0 %v595
        %v665 = vpop.f32.mrf.mxu0
        %v666 = vadd.f32 0.0, %v665
        %v667 = vpop.f32.mrf.mxu0
        %668 = vdwg.mxu0
        %v669 = vlaneseq
        %v670 = vshrl.u32 %v669, 7
        %v671 = vlaneseq
        %v672 = vand.u32 %v671, 127
        %vm673 = vcmp.lt.s32.totalorder %v670, %v672
        %v674 = vsel %vm673, 1, 0
        %vm675 = vcmp.eq.s32.totalorder %v674, 1
        %v676 = vsel %vm675, -inf, %v438
        %v677 = vsel %vm675, -inf, %v514
        %v678 = vsel %vm675, -inf, %v590
        %v679 = vsel %vm675, -inf, %v666
        %v680 = vsel %vm366, %v676, -inf
        %681 = vmax.xlane.f32.xlu0 %v680
        %v682 = vpop.xlane.xlu0 %681
        %v683 = vsel %vm366, %v677, -inf
        %684 = vmax.xlane.f32.xlu0 %v683
        %v685 = vpop.xlane.xlu0 %684
        %v686 = vsel %vm366, %v678, -inf
        %687 = vmax.xlane.f32.xlu0 %v686
        %v688 = vpop.xlane.xlu0 %687
        %v689 = vsel %vm366, %v679, -inf
        %690 = vmax.xlane.f32.xlu0 %v689
        %v691 = vpop.xlane.xlu0 %690
        %v692 = vsub.f32 %v676, %v682
        %v693 = vsub.f32 %v677, %v685
        %v694 = vsub.f32 %v678, %v688
        %v695 = vsub.f32 %v679, %v691
        %v696 = vmul.f32 %v692, 1.442695
        %v697 = vpow.pop %v696
        %v698 = vmul.f32 %v693, 1.442695
        %v699 = vpow.pop %v698
        %v700 = vmul.f32 %v694, 1.442695
        %v701 = vpow.pop %v700
        %v702 = vmul.f32 %v695, 1.442695
        %v703 = vpow.pop %v702
        %v704 = vsel %vm366, %v697, 0.0
        %705 = vadd.xlane.f32.xlu0 %v704
        %v706 = vpop.xlane.xlu0 %705
        %v707 = vsel %vm366, %v699, 0.0
        %708 = vadd.xlane.f32.xlu0 %v707
        %v709 = vpop.xlane.xlu0 %708
        %v710 = vsel %vm366, %v701, 0.0
        %711 = vadd.xlane.f32.xlu0 %v710
        %v712 = vpop.xlane.xlu0 %711
        %v713 = vsel %vm366, %v703, 0.0
        %714 = vadd.xlane.f32.xlu0 %v713
        %v715 = vpop.xlane.xlu0 %714
        %v716 = vrcp.pop %v706
        %v717 = vrcp.pop %v709
        %v718 = vrcp.pop %v712
        %v719 = vrcp.pop %v715
        %v720 = vmul.f32 %v697, %v716
        %v721 = vmul.f32 %v699, %v717
        %v722 = vmul.f32 %v701, %v718
        %v723 = vmul.f32 %v703, %v719
        %724 = vrot.lane.b32.xlu0 %v354, 64
        %v725 = vpop.permute.xlu0 %724
        %v728 = vsel %vm366, %v720, 0
        %730 = vmatprep.subr.mxu0 0.0
        %731 = vmatpush1.msra.mxu0 0.0
        %732 = vmatprep.subr.mxu0 0.0
        %733 = vmatpush1.msra.mxu0 0.0
        %734 = vmatprep.subr.mxu0 0.0
        %735 = vmatpush1.msra.mxu0 0.0
        %736 = vmatprep.subr.mxu0 0.0
        %737 = vmatpush1.msra.mxu0 0.0
        %738 = vmatprep.subr.mxu0 0.0
        %739 = vmatpush1.msra.mxu0 0.0
        %740 = vmatprep.subr.mxu0 0.0
        %741 = vmatpush1.msra.mxu0 0.0
        %742 = vmatprep.subr.mxu0 0.0
        %743 = vmatpush1.msra.mxu0 0.0
        %744 = vmatprep.subr.mxu0 0.0
        %745 = vmatpush1.msra.mxu0 0.0
        %746 = vmatprep.subr.mxu0 0.0
        %747 = vmatpush1.msra.mxu0 0.0
        %748 = vmatprep.subr.mxu0 0.0
        %749 = vmatpush1.msra.mxu0 0.0
        %750 = vmatprep.subr.mxu0 0.0
        %751 = vmatpush1.msra.mxu0 0.0
        %752 = vmatprep.subr.mxu0 0.0
        %753 = vmatpush1.msra.mxu0 0.0
        %754 = vmatprep.subr.mxu0 0.0
        %755 = vmatpush1.msra.mxu0 0.0
        %756 = vmatprep.subr.mxu0 0.0
        %757 = vmatpush1.msra.mxu0 0.0
        %758 = vmatprep.subr.mxu0 0.0
        %759 = vmatpush1.msra.mxu0 0.0
        %760 = vmatprep.subr.mxu0 0.0
        %761 = vmatpush1.msra.mxu0 %v725
        %762 = vmatprep.subr.mxu0 0.0
        %763 = vmatpush2.msra.mxu0 0.0
        %764 = vmatprep.subr.mxu0 0.0
        %765 = vmatpush2.msra.mxu0 0.0
        %766 = vmatprep.subr.mxu0 0.0
        %767 = vmatpush2.msra.mxu0 0.0
        %768 = vmatprep.subr.mxu0 0.0
        %769 = vmatpush2.msra.mxu0 0.0
        %770 = vmatprep.subr.mxu0 0.0
        %771 = vmatpush2.msra.mxu0 0.0
        %772 = vmatprep.subr.mxu0 0.0
        %773 = vmatpush2.msra.mxu0 0.0
        %774 = vmatprep.subr.mxu0 0.0
        %775 = vmatpush2.msra.mxu0 0.0
        %776 = vmatprep.subr.mxu0 0.0
        %777 = vmatpush2.msra.mxu0 0.0
        %778 = vmatprep.subr.mxu0 0.0
        %779 = vmatpush2.msra.mxu0 0.0
        %780 = vmatprep.subr.mxu0 0.0
        %781 = vmatpush2.msra.mxu0 0.0
        %782 = vmatprep.subr.mxu0 0.0
        %783 = vmatpush2.msra.mxu0 0.0
        %784 = vmatprep.subr.mxu0 0.0
        %785 = vmatpush2.msra.mxu0 0.0
        %786 = vmatprep.subr.mxu0 0.0
        %787 = vmatpush2.msra.mxu0 0.0
        %788 = vmatprep.subr.mxu0 0.0
        %789 = vmatpush2.msra.mxu0 0.0
        %790 = vmatprep.subr.mxu0 0.0
        %791 = vmatpush2.msra.mxu0 0.0
        %792 = vmatprep.subr.mxu0 0.0
        %793 = vmatpush2.msra.mxu0 0.0
        %794 = vmatprep.mubr.f32.mxu0 0.0
        %795 = vmatmul.mubr.f32.gmra.mxu0 %v728
        %v796 = vpop.f32.mrf.mxu0
        %v797 = vadd.f32 0.0, %v796
        %v798 = vpop.f32.mrf.mxu0
        %799 = vdwg.mxu0
        %800 = vrot.lane.b32.xlu0 %v359, 64
        %v801 = vpop.permute.xlu0 %800
        %v804 = vsel %vm366, %v721, 0
        %806 = vmatprep.subr.mxu0 0.0
        %807 = vmatpush1.msra.mxu0 0.0
        %808 = vmatprep.subr.mxu0 0.0
        %809 = vmatpush1.msra.mxu0 0.0
        %810 = vmatprep.subr.mxu0 0.0
        %811 = vmatpush1.msra.mxu0 0.0
        %812 = vmatprep.subr.mxu0 0.0
        %813 = vmatpush1.msra.mxu0 0.0
        %814 = vmatprep.subr.mxu0 0.0
        %815 = vmatpush1.msra.mxu0 0.0
        %816 = vmatprep.subr.mxu0 0.0
        %817 = vmatpush1.msra.mxu0 0.0
        %818 = vmatprep.subr.mxu0 0.0
        %819 = vmatpush1.msra.mxu0 0.0
        %820 = vmatprep.subr.mxu0 0.0
        %821 = vmatpush1.msra.mxu0 0.0
        %822 = vmatprep.subr.mxu0 0.0
        %823 = vmatpush1.msra.mxu0 0.0
        %824 = vmatprep.subr.mxu0 0.0
        %825 = vmatpush1.msra.mxu0 0.0
        %826 = vmatprep.subr.mxu0 0.0
        %827 = vmatpush1.msra.mxu0 0.0
        %828 = vmatprep.subr.mxu0 0.0
        %829 = vmatpush1.msra.mxu0 0.0
        %830 = vmatprep.subr.mxu0 0.0
        %831 = vmatpush1.msra.mxu0 0.0
        %832 = vmatprep.subr.mxu0 0.0
        %833 = vmatpush1.msra.mxu0 0.0
        %834 = vmatprep.subr.mxu0 0.0
        %835 = vmatpush1.msra.mxu0 0.0
        %836 = vmatprep.subr.mxu0 0.0
        %837 = vmatpush1.msra.mxu0 %v801
        %838 = vmatprep.subr.mxu0 0.0
        %839 = vmatpush2.msra.mxu0 0.0
        %840 = vmatprep.subr.mxu0 0.0
        %841 = vmatpush2.msra.mxu0 0.0
        %842 = vmatprep.subr.mxu0 0.0
        %843 = vmatpush2.msra.mxu0 0.0
        %844 = vmatprep.subr.mxu0 0.0
        %845 = vmatpush2.msra.mxu0 0.0
        %846 = vmatprep.subr.mxu0 0.0
        %847 = vmatpush2.msra.mxu0 0.0
        %848 = vmatprep.subr.mxu0 0.0
        %849 = vmatpush2.msra.mxu0 0.0
        %850 = vmatprep.subr.mxu0 0.0
        %851 = vmatpush2.msra.mxu0 0.0
        %852 = vmatprep.subr.mxu0 0.0
        %853 = vmatpush2.msra.mxu0 0.0
        %854 = vmatprep.subr.mxu0 0.0
        %855 = vmatpush2.msra.mxu0 0.0
        %856 = vmatprep.subr.mxu0 0.0
        %857 = vmatpush2.msra.mxu0 0.0
        %858 = vmatprep.subr.mxu0 0.0
        %859 = vmatpush2.msra.mxu0 0.0
        %860 = vmatprep.subr.mxu0 0.0
        %861 = vmatpush2.msra.mxu0 0.0
        %862 = vmatprep.subr.mxu0 0.0
        %863 = vmatpush2.msra.mxu0 0.0
        %864 = vmatprep.subr.mxu0 0.0
        %865 = vmatpush2.msra.mxu0 0.0
        %866 = vmatprep.subr.mxu0 0.0
        %867 = vmatpush2.msra.mxu0 0.0
        %868 = vmatprep.subr.mxu0 0.0
        %869 = vmatpush2.msra.mxu0 0.0
        %870 = vmatprep.mubr.f32.mxu0 0.0
        %871 = vmatmul.mubr.f32.gmra.mxu0 %v804
        %v872 = vpop.f32.mrf.mxu0
        %v873 = vadd.f32 0.0, %v872
        %v874 = vpop.f32.mrf.mxu0
        %875 = vdwg.mxu0
        %876 = vrot.lane.b32.xlu0 %v361, 64
        %v877 = vpop.permute.xlu0 %876
        %v880 = vsel %vm366, %v722, 0
        %882 = vmatprep.subr.mxu0 0.0
        %883 = vmatpush1.msra.mxu0 0.0
        %884 = vmatprep.subr.mxu0 0.0
        %885 = vmatpush1.msra.mxu0 0.0
        %886 = vmatprep.subr.mxu0 0.0
        %887 = vmatpush1.msra.mxu0 0.0
        %888 = vmatprep.subr.mxu0 0.0
        %889 = vmatpush1.msra.mxu0 0.0
        %890 = vmatprep.subr.mxu0 0.0
        %891 = vmatpush1.msra.mxu0 0.0
        %892 = vmatprep.subr.mxu0 0.0
        %893 = vmatpush1.msra.mxu0 0.0
        %894 = vmatprep.subr.mxu0 0.0
        %895 = vmatpush1.msra.mxu0 0.0
        %896 = vmatprep.subr.mxu0 0.0
        %897 = vmatpush1.msra.mxu0 0.0
        %898 = vmatprep.subr.mxu0 0.0
        %899 = vmatpush1.msra.mxu0 0.0
        %900 = vmatprep.subr.mxu0 0.0
        %901 = vmatpush1.msra.mxu0 0.0
        %902 = vmatprep.subr.mxu0 0.0
        %903 = vmatpush1.msra.mxu0 0.0
        %904 = vmatprep.subr.mxu0 0.0
        %905 = vmatpush1.msra.mxu0 0.0
        %906 = vmatprep.subr.mxu0 0.0
        %907 = vmatpush1.msra.mxu0 0.0
        %908 = vmatprep.subr.mxu0 0.0
        %909 = vmatpush1.msra.mxu0 0.0
        %910 = vmatprep.subr.mxu0 0.0
        %911 = vmatpush1.msra.mxu0 0.0
        %912 = vmatprep.subr.mxu0 0.0
        %913 = vmatpush1.msra.mxu0 %v877
        %914 = vmatprep.subr.mxu0 0.0
        %915 = vmatpush2.msra.mxu0 0.0
        %916 = vmatprep.subr.mxu0 0.0
        %917 = vmatpush2.msra.mxu0 0.0
        %918 = vmatprep.subr.mxu0 0.0
        %919 = vmatpush2.msra.mxu0 0.0
        %920 = vmatprep.subr.mxu0 0.0
        %921 = vmatpush2.msra.mxu0 0.0
        %922 = vmatprep.subr.mxu0 0.0
        %923 = vmatpush2.msra.mxu0 0.0
        %924 = vmatprep.subr.mxu0 0.0
        %925 = vmatpush2.msra.mxu0 0.0
        %926 = vmatprep.subr.mxu0 0.0
        %927 = vmatpush2.msra.mxu0 0.0
        %928 = vmatprep.subr.mxu0 0.0
        %929 = vmatpush2.msra.mxu0 0.0
        %930 = vmatprep.subr.mxu0 0.0
        %931 = vmatpush2.msra.mxu0 0.0
        %932 = vmatprep.subr.mxu0 0.0
        %933 = vmatpush2.msra.mxu0 0.0
        %934 = vmatprep.subr.mxu0 0.0
        %935 = vmatpush2.msra.mxu0 0.0
        %936 = vmatprep.subr.mxu0 0.0
        %937 = vmatpush2.msra.mxu0 0.0
        %938 = vmatprep.subr.mxu0 0.0
        %939 = vmatpush2.msra.mxu0 0.0
        %940 = vmatprep.subr.mxu0 0.0
        %941 = vmatpush2.msra.mxu0 0.0
        %942 = vmatprep.subr.mxu0 0.0
        %943 = vmatpush2.msra.mxu0 0.0
        %944 = vmatprep.subr.mxu0 0.0
        %945 = vmatpush2.msra.mxu0 0.0
        %946 = vmatprep.mubr.f32.mxu0 0.0
        %947 = vmatmul.mubr.f32.gmra.mxu0 %v880
        %v948 = vpop.f32.mrf.mxu0
        %v949 = vadd.f32 0.0, %v948
        %v950 = vpop.f32.mrf.mxu0
        %951 = vdwg.mxu0
        %952 = vrot.lane.b32.xlu0 %v363, 64
        %v953 = vpop.permute.xlu0 %952
        %v956 = vsel %vm366, %v723, 0
        %958 = vmatprep.subr.mxu0 0.0
        %959 = vmatpush1.msra.mxu0 0.0
        %960 = vmatprep.subr.mxu0 0.0
        %961 = vmatpush1.msra.mxu0 0.0
        %962 = vmatprep.subr.mxu0 0.0
        %963 = vmatpush1.msra.mxu0 0.0
        %964 = vmatprep.subr.mxu0 0.0
        %965 = vmatpush1.msra.mxu0 0.0
        %966 = vmatprep.subr.mxu0 0.0
        %967 = vmatpush1.msra.mxu0 0.0
        %968 = vmatprep.subr.mxu0 0.0
        %969 = vmatpush1.msra.mxu0 0.0
        %970 = vmatprep.subr.mxu0 0.0
        %971 = vmatpush1.msra.mxu0 0.0
        %972 = vmatprep.subr.mxu0 0.0
        %973 = vmatpush1.msra.mxu0 0.0
        %974 = vmatprep.subr.mxu0 0.0
        %975 = vmatpush1.msra.mxu0 0.0
        %976 = vmatprep.subr.mxu0 0.0
        %977 = vmatpush1.msra.mxu0 0.0
        %978 = vmatprep.subr.mxu0 0.0
        %979 = vmatpush1.msra.mxu0 0.0
        %980 = vmatprep.subr.mxu0 0.0
        %981 = vmatpush1.msra.mxu0 0.0
        %982 = vmatprep.subr.mxu0 0.0
        %983 = vmatpush1.msra.mxu0 0.0
        %984 = vmatprep.subr.mxu0 0.0
        %985 = vmatpush1.msra.mxu0 0.0
        %986 = vmatprep.subr.mxu0 0.0
        %987 = vmatpush1.msra.mxu0 0.0
        %988 = vmatprep.subr.mxu0 0.0
        %989 = vmatpush1.msra.mxu0 %v953
        %990 = vmatprep.subr.mxu0 0.0
        %991 = vmatpush2.msra.mxu0 0.0
        %992 = vmatprep.subr.mxu0 0.0
        %993 = vmatpush2.msra.mxu0 0.0
        %994 = vmatprep.subr.mxu0 0.0
        %995 = vmatpush2.msra.mxu0 0.0
        %996 = vmatprep.subr.mxu0 0.0
        %997 = vmatpush2.msra.mxu0 0.0
        %998 = vmatprep.subr.mxu0 0.0
        %999 = vmatpush2.msra.mxu0 0.0
        %1000 = vmatprep.subr.mxu0 0.0
        %1001 = vmatpush2.msra.mxu0 0.0
        %1002 = vmatprep.subr.mxu0 0.0
        %1003 = vmatpush2.msra.mxu0 0.0
        %1004 = vmatprep.subr.mxu0 0.0
        %1005 = vmatpush2.msra.mxu0 0.0
        %1006 = vmatprep.subr.mxu0 0.0
        %1007 = vmatpush2.msra.mxu0 0.0
        %1008 = vmatprep.subr.mxu0 0.0
        %1009 = vmatpush2.msra.mxu0 0.0
        %1010 = vmatprep.subr.mxu0 0.0
        %1011 = vmatpush2.msra.mxu0 0.0
        %1012 = vmatprep.subr.mxu0 0.0
        %1013 = vmatpush2.msra.mxu0 0.0
        %1014 = vmatprep.subr.mxu0 0.0
        %1015 = vmatpush2.msra.mxu0 0.0
        %1016 = vmatprep.subr.mxu0 0.0
        %1017 = vmatpush2.msra.mxu0 0.0
        %1018 = vmatprep.subr.mxu0 0.0
        %1019 = vmatpush2.msra.mxu0 0.0
        %1020 = vmatprep.subr.mxu0 0.0
        %1021 = vmatpush2.msra.mxu0 0.0
        %1022 = vmatprep.mubr.f32.mxu0 0.0
        %1023 = vmatmul.mubr.f32.gmra.mxu0 %v956
        %v1024 = vpop.f32.mrf.mxu0
        %v1025 = vadd.f32 0.0, %v1024
        %v1026 = vpop.f32.mrf.mxu0
        %1027 = vdwg.mxu0
        %1029 = vrot.lane.b32.xlu0 %v873, 8
        %v1030 = vpop.permute.xlu0 %1029
        %1033 = vrot.lane.b32.xlu0 %v949, 16
        %v1034 = vpop.permute.xlu0 %1033
        %1037 = vrot.lane.b32.xlu0 %v1025, 24
        %v1038 = vpop.permute.xlu0 %1037
        %v1040 = vsel %vm366, %v797, %v1030
        %vm1041 = vcmask 130048
        %v1042 = vsel %vm1041, %v1040, %v1034
        %vm1043 = vcmask 195584
        %v1044 = vsel %vm1043, %v1042, %v1038
        %s1045 = scalar_lea.vmem [#allocation8], %s277
        %v1046 = vld [vmem:[%s1045] sm:$0xff]
        %v1047 = vld [vmem:[%s1045 + $0x8] sm:$0xff]
        %v1048 = vld [vmem:[%s1045 + $0x10] sm:$0xff]
        %v1049 = vld [vmem:[%s1045 + $0x18] sm:$0xff]
        %v1051 = vsel %vm283, %v1044, 0
        %1053 = vmatprep.subr.mxu0 0.0
        %1054 = vmatpush1.msra.mxu0 0.0
        %1055 = vmatprep.subr.mxu0 0.0
        %1056 = vmatpush1.msra.mxu0 0.0
        %1057 = vmatprep.subr.mxu0 0.0
        %1058 = vmatpush1.msra.mxu0 0.0
        %1059 = vmatprep.subr.mxu0 0.0
        %1060 = vmatpush1.msra.mxu0 0.0
        %1061 = vmatprep.subr.mxu0 0.0
        %1062 = vmatpush1.msra.mxu0 0.0
        %1063 = vmatprep.subr.mxu0 0.0
        %1064 = vmatpush1.msra.mxu0 0.0
        %1065 = vmatprep.subr.mxu0 0.0
        %1066 = vmatpush1.msra.mxu0 0.0
        %1067 = vmatprep.subr.mxu0 0.0
        %1068 = vmatpush1.msra.mxu0 0.0
        %1069 = vmatprep.subr.mxu0 0.0
        %1070 = vmatpush1.msra.mxu0 0.0
        %1071 = vmatprep.subr.mxu0 0.0
        %1072 = vmatpush1.msra.mxu0 0.0
        %1073 = vmatprep.subr.mxu0 0.0
        %1074 = vmatpush1.msra.mxu0 0.0
        %1075 = vmatprep.subr.mxu0 0.0
        %1076 = vmatpush1.msra.mxu0 0.0
        %1077 = vmatprep.subr.mxu0 0.0
        %1078 = vmatpush1.msra.mxu0 %v1049
        %1079 = vmatprep.subr.mxu0 0.0
        %1080 = vmatpush1.msra.mxu0 %v1048
        %1081 = vmatprep.subr.mxu0 0.0
        %1082 = vmatpush1.msra.mxu0 %v1047
        %1083 = vmatprep.subr.mxu0 0.0
        %1084 = vmatpush1.msra.mxu0 %v1046
        %1085 = vmatprep.subr.mxu0 0.0
        %1086 = vmatpush2.msra.mxu0 0.0
        %1087 = vmatprep.subr.mxu0 0.0
        %1088 = vmatpush2.msra.mxu0 0.0
        %1089 = vmatprep.subr.mxu0 0.0
        %1090 = vmatpush2.msra.mxu0 0.0
        %1091 = vmatprep.subr.mxu0 0.0
        %1092 = vmatpush2.msra.mxu0 0.0
        %1093 = vmatprep.subr.mxu0 0.0
        %1094 = vmatpush2.msra.mxu0 0.0
        %1095 = vmatprep.subr.mxu0 0.0
        %1096 = vmatpush2.msra.mxu0 0.0
        %1097 = vmatprep.subr.mxu0 0.0
        %1098 = vmatpush2.msra.mxu0 0.0
        %1099 = vmatprep.subr.mxu0 0.0
        %1100 = vmatpush2.msra.mxu0 0.0
        %1101 = vmatprep.subr.mxu0 0.0
        %1102 = vmatpush2.msra.mxu0 0.0
        %1103 = vmatprep.subr.mxu0 0.0
        %1104 = vmatpush2.msra.mxu0 0.0
        %1105 = vmatprep.subr.mxu0 0.0
        %1106 = vmatpush2.msra.mxu0 0.0
        %1107 = vmatprep.subr.mxu0 0.0
        %1108 = vmatpush2.msra.mxu0 0.0
        %1109 = vmatprep.subr.mxu0 0.0
        %1110 = vmatpush2.msra.mxu0 0.0
        %1111 = vmatprep.subr.mxu0 0.0
        %1112 = vmatpush2.msra.mxu0 0.0
        %1113 = vmatprep.subr.mxu0 0.0
        %1114 = vmatpush2.msra.mxu0 0.0
        %1115 = vmatprep.subr.mxu0 0.0
        %1116 = vmatpush2.msra.mxu0 0.0
        %1117 = vmatprep.mubr.f32.mxu0 0.0
        %1118 = vmatmul.mubr.f32.gmra.mxu0 %v1051
        %v1119 = vpop.f32.mrf.mxu0
        %v1120 = vadd.f32 0.0, %v1119
        %v1121 = vpop.f32.mrf.mxu0
        %1122 = vdwg.mxu0
        %v1123 = vadd.f32 %v276, %v1120
        %1124 = vst.msk [vmem:[#allocation2] sm:$0xff] %vm283, %v1123
        %p1125 = scmp.eq.s32.totalorder %s28, 1
        // Predicated region
        $region57: #{tpu_custom_call.1} parent=35 // pred_check
          %p1126 = pneg %p1125
        $region58: #{tpu_custom_call.1} parent=35 // pred_check_branch
          %1128 = sbr.rel (%p1126) target = $region60
        $region59: #{tpu_custom_call.1} parent=35 // pred_region
          %v1129 = vld [vmem:[#allocation9] sm:$0xff]
          %v1130 = vld [vmem:[#allocation9 + $0x8] sm:$0xff]
          %v1131 = vld [vmem:[#allocation9 + $0x10] sm:$0xff]
          %v1132 = vld [vmem:[#allocation9 + $0x18] sm:$0xff]
          %v1134 = vsel %vm283, %v1123, 0
          %1136 = vmatprep.subr.mxu0 0.0
          %1137 = vmatpush1.msra.mxu0 0.0
          %1138 = vmatprep.subr.mxu0 0.0
          %1139 = vmatpush1.msra.mxu0 0.0
          %1140 = vmatprep.subr.mxu0 0.0
          %1141 = vmatpush1.msra.mxu0 0.0
          %1142 = vmatprep.subr.mxu0 0.0
          %1143 = vmatpush1.msra.mxu0 0.0
          %1144 = vmatprep.subr.mxu0 0.0
          %1145 = vmatpush1.msra.mxu0 0.0
          %1146 = vmatprep.subr.mxu0 0.0
          %1147 = vmatpush1.msra.mxu0 0.0
          %1148 = vmatprep.subr.mxu0 0.0
          %1149 = vmatpush1.msra.mxu0 0.0
          %1150 = vmatprep.subr.mxu0 0.0
          %1151 = vmatpush1.msra.mxu0 0.0
          %1152 = vmatprep.subr.mxu0 0.0
          %1153 = vmatpush1.msra.mxu0 0.0
          %1154 = vmatprep.subr.mxu0 0.0
          %1155 = vmatpush1.msra.mxu0 0.0
          %1156 = vmatprep.subr.mxu0 0.0
          %1157 = vmatpush1.msra.mxu0 0.0
          %1158 = vmatprep.subr.mxu0 0.0
          %1159 = vmatpush1.msra.mxu0 0.0
          %1160 = vmatprep.subr.mxu0 0.0
          %1161 = vmatpush1.msra.mxu0 %v1132
          %1162 = vmatprep.subr.mxu0 0.0
          %1163 = vmatpush1.msra.mxu0 %v1131
          %1164 = vmatprep.subr.mxu0 0.0
          %1165 = vmatpush1.msra.mxu0 %v1130
          %1166 = vmatprep.subr.mxu0 0.0
          %1167 = vmatpush1.msra.mxu0 %v1129
          %1168 = vmatprep.subr.mxu0 0.0
          %1169 = vmatpush2.msra.mxu0 0.0
          %1170 = vmatprep.subr.mxu0 0.0
          %1171 = vmatpush2.msra.mxu0 0.0
          %1172 = vmatprep.subr.mxu0 0.0
          %1173 = vmatpush2.msra.mxu0 0.0
          %1174 = vmatprep.subr.mxu0 0.0
          %1175 = vmatpush2.msra.mxu0 0.0
          %1176 = vmatprep.subr.mxu0 0.0
          %1177 = vmatpush2.msra.mxu0 0.0
          %1178 = vmatprep.subr.mxu0 0.0
          %1179 = vmatpush2.msra.mxu0 0.0
          %1180 = vmatprep.subr.mxu0 0.0
          %1181 = vmatpush2.msra.mxu0 0.0
          %1182 = vmatprep.subr.mxu0 0.0
          %1183 = vmatpush2.msra.mxu0 0.0
          %1184 = vmatprep.subr.mxu0 0.0
          %1185 = vmatpush2.msra.mxu0 0.0
          %1186 = vmatprep.subr.mxu0 0.0
          %1187 = vmatpush2.msra.mxu0 0.0
          %1188 = vmatprep.subr.mxu0 0.0
          %1189 = vmatpush2.msra.mxu0 0.0
          %1190 = vmatprep.subr.mxu0 0.0
          %1191 = vmatpush2.msra.mxu0 0.0
          %1192 = vmatprep.subr.mxu0 0.0
          %1193 = vmatpush2.msra.mxu0 0.0
          %1194 = vmatprep.subr.mxu0 0.0
          %1195 = vmatpush2.msra.mxu0 0.0
          %1196 = vmatprep.subr.mxu0 0.0
          %1197 = vmatpush2.msra.mxu0 0.0
          %1198 = vmatprep.subr.mxu0 0.0
          %1199 = vmatpush2.msra.mxu0 0.0
          %1200 = vmatprep.mubr.f32.mxu0 0.0
          %1201 = vmatmul.mubr.f32.gmra.mxu0 %v1134
          %v1202 = vpop.f32.mrf.mxu0
          %v1203 = vadd.f32 0.0, %v1202
          %v1204 = vpop.f32.mrf.mxu0
          %1205 = vdwg.mxu0
          %1206 = vst [vmem:[%s268] sm:$0xff] %v1203
        $region60: #{tpu_custom_call.1} parent=35 // pred_fallthru
          _
        %s1207 = sand.u32 %s132, 1
        %s1208 = scalar_lea.sflag [#allocation5], %s1207
        %s1209 = sand.u32 %s132, 1
        %s1210 = smul.addr %s1209, 8
        %s1211 = scalar_lea.vmem [#allocation11], %s1210
        // Predicated region
        $region61: #{tpu_custom_call.1} parent=35 // pred_check
          %p1212 = pneg %p142
        $region62: #{tpu_custom_call.1} parent=35 // pred_check_branch
          %1214 = sbr.rel (%p1212) target = $region64
        $region63: #{tpu_custom_call.1} parent=35 // pred_region
          %s1216 = ssub.s32 128, 128
          %1217 = vsyncadd %s1208, %s1216
          %s1218 = smul.addr %s27, 128
          %s1219 = scalar_lea.hbm %s4, %s1218
          %s1221 = sshll.u32 %s1211, 4
          %s1222 = int_to_ptr.vmem [resolvable:$true] %s1221
          %1224 = dma.vmem_to_hbm [thread:$0]  %s1222, 128, %s1219, %s1208
        $region64: #{tpu_custom_call.1} parent=35 // pred_fallthru
          _
      $region36: #{tpu_custom_call.1} parent=5 // pred_fallthru
        _
      %p1225 = scmp.le.s32.totalorder 2, %s18
      // Predicated region
      $region65: #{tpu_custom_call.1} parent=5 // pred_check
        %p1226 = pneg %p1225
      $region66: #{tpu_custom_call.1} parent=5 // pred_check_branch
        %1228 = sbr.rel (%p1226) target = $region68
      $region67: #{tpu_custom_call.1} parent=5 // pred_region
        %s1229 = ssub.s32 %s18, 2
        // Predicated region
        $region69: #{tpu_custom_call.1} parent=67 // pred_check
          %p1230 = pneg %p148
        $region70: #{tpu_custom_call.1} parent=67 // pred_check_branch
          %1232 = sbr.rel (%p1230) target = $region72
        $region71: #{tpu_custom_call.1} parent=67 // pred_region
          %s1233 = sand.u32 %s133, 1
          %s1234 = scalar_lea.sflag [#allocation5], %s1233
          %s1235 = sand.u32 %s133, 1
          %s1236 = smul.addr %s1235, 8
          %s1237 = scalar_lea.vmem [#allocation11], %s1236
          %1238 = dma.done %s1234, 128
        $region72: #{tpu_custom_call.1} parent=67 // pred_fallthru
          _
      $region68: #{tpu_custom_call.1} parent=5 // pred_fallthru
        _
    $region6: #{tpu_custom_call.1} parent=1 // loop_footer
      %s22 = sadd.s32 1, %s18
    $region7: #{tpu_custom_call.1} parent=1 // loop_footer_branch
      %17 = sbr.rel target = $region3
    $region8: #{tpu_custom_call.1} parent=1 // loop_exit
      _
    %1239 = vsyncpa [#allocation4], 1
    %s1240 = scalar_lea.sflag [#allocation4], 1
    %1241 = vsyncpa %s1240, 1
    %1242 = vsyncpa [#allocation7], 1
    %1243 = vsyncpa [#allocation10], 1
    %1244 = vsyncpa [#allocation5], 1
    %s1245 = scalar_lea.sflag [#allocation5], 1
    %1246 = vsyncpa %s1245, 1

</llo_original>
